<compile_context>
chip_gen: v5e
topology: v5e:2x2
jax: 0.10.0
libtpu: 0.0.40
codegen_flags: <defaults>
</compile_context>

<pallas_src>
import functools
import math

import jax
import jax.numpy as jnp
from jax.experimental import pallas as pl
from jax.experimental.pallas import tpu as pltpu


# ---------------------------------------------------------------------------
# In-kernel helpers
# ---------------------------------------------------------------------------

def _mm(a, b):
    """MXU matmul: bf16 operands, f32 accumulation."""
    return jnp.dot(a.astype(jnp.bfloat16), b.astype(jnp.bfloat16),
                   preferred_element_type=jnp.float32)


def _mm_nt(a, b):
    """a @ b.T (contract last dims of both) without materializing a transpose."""
    return jax.lax.dot_general(
        a.astype(jnp.bfloat16), b.astype(jnp.bfloat16),
        (((1,), (1,)), ((), ())),
        preferred_element_type=jnp.float32)


def _layer_norm(x, g, b):
    mu = jnp.mean(x, axis=-1, keepdims=True)
    var = jnp.mean((x - mu) ** 2, axis=-1, keepdims=True)
    return (x - mu) * jax.lax.rsqrt(var + 1e-5) * g + b


def _mha(q2d, k2d, v2d, N, Lq, Lk, H, dh):
    """Multi-head attention on batch-major 2-D slabs, heads split in-kernel.

    q2d : (N*Lq, E)   k2d, v2d : (N*Lk, E)   ->  (N*Lq, E)
    The 1/sqrt(dh) scale is already folded into the q projection.
    """
    # TODO(synk): attn_mask / key_padding_mask would become an additive bias on `s`.
    batch_outs = []
    for n in range(N):                                   # static, fully unrolled
        qn = q2d[n * Lq:(n + 1) * Lq, :]
        kn = k2d[n * Lk:(n + 1) * Lk, :]
        vn = v2d[n * Lk:(n + 1) * Lk, :]
        head_outs = []
        for h in range(H):
            qh = qn[:, h * dh:(h + 1) * dh]
            kh = kn[:, h * dh:(h + 1) * dh]
            vh = vn[:, h * dh:(h + 1) * dh]
            s = _mm_nt(qh, kh)                           # (Lq, Lk)
            s = s - jnp.max(s, axis=-1, keepdims=True)
            p = jnp.exp(s)
            p = p * pl.reciprocal(jnp.sum(p, axis=-1, keepdims=True), approx=True)
            head_outs.append(_mm(p, vh))                 # (Lq, dh)
        batch_outs.append(jnp.concatenate(head_outs, axis=1))   # (Lq, E)
    return jnp.concatenate(batch_outs, axis=0)           # (N*Lq, E)


# ---------------------------------------------------------------------------
# The fused decoder-layer kernel (post-norm / normalize_before=False,
# dropout == identity at eval).
# TODO(synk): the normalize_before=True (forward_pre) variant is not emitted.
# ---------------------------------------------------------------------------

def _decoder_layer_kernel(
    # activations (batch-major 2-D slabs)
    tgt_ref, mem_ref, pos_ref, qpos_ref,
    # self-attention params (q/k fused, scale folded into q)
    sa_wqk_ref, sa_bqk_ref, sa_wv_ref, sa_bv_ref, sa_wo_ref, sa_bo_ref,
    # cross-attention params (scale folded into q)
    ca_wq_ref, ca_bq_ref, ca_wk_ref, ca_bk_ref, ca_wv_ref, ca_bv_ref,
    ca_wo_ref, ca_bo_ref,
    # FFN params
    w1_ref, b1_ref, w2_ref, b2_ref,
    # LayerNorm params
    n1g_ref, n1b_ref, n2g_ref, n2b_ref, n3g_ref, n3b_ref,
    # output
    out_ref,
    *, N, Lq, Lk, H, dh,
):
    E = H * dh
    tgt = tgt_ref[...]            # (N*Lq, E)
    qpos = qpos_ref[...]          # (N*Lq, E)
    mem = mem_ref[...]            # (N*Lk, E)

    # ---- self-attention: q = k = tgt + query_pos, value = tgt ----
    qk_in = tgt + qpos
    qk = _mm(qk_in, sa_wqk_ref[...]) + sa_bqk_ref[...]   # fused (E, 2E) projection
    q = qk[:, :E]
    k = qk[:, E:]
    v = _mm(tgt, sa_wv_ref[...]) + sa_bv_ref[...]
    attn = _mha(q, k, v, N, Lq, Lq, H, dh)
    sa_out = _mm(attn, sa_wo_ref[...]) + sa_bo_ref[...]
    x = _layer_norm(tgt + sa_out, n1g_ref[...], n1b_ref[...])

    # ---- cross-attention: q = x + query_pos, k = memory + pos, v = memory ----
    q = _mm(x + qpos, ca_wq_ref[...]) + ca_bq_ref[...]
    k = _mm(mem + pos_ref[...], ca_wk_ref[...]) + ca_bk_ref[...]
    v = _mm(mem, ca_wv_ref[...]) + ca_bv_ref[...]
    attn = _mha(q, k, v, N, Lq, Lk, H, dh)
    ca_out = _mm(attn, ca_wo_ref[...]) + ca_bo_ref[...]
    x = _layer_norm(x + ca_out, n2g_ref[...], n2b_ref[...])

    # ---- FFN: linear2(relu(linear1(x))) ----
    h1 = jnp.maximum(_mm(x, w1_ref[...]) + b1_ref[...], 0.0)
    ffn_out = _mm(h1, w2_ref[...]) + b2_ref[...]
    out_ref[...] = _layer_norm(x + ffn_out, n3g_ref[...], n3b_ref[...])


# ---------------------------------------------------------------------------
# pallas_call wrapper
# ---------------------------------------------------------------------------

def _whole_spec(shape):
    nd = len(shape)
    return pl.BlockSpec(shape, lambda i, _nd=nd: (0,) * _nd)


_PARAM_ORDER = (
    "sa_wqk", "sa_bqk", "sa_wv", "sa_bv", "sa_wo", "sa_bo",
    "ca_wq", "ca_bq", "ca_wk", "ca_bk", "ca_wv", "ca_bv", "ca_wo", "ca_bo",
    "w1", "b1", "w2", "b2",
    "n1_g", "n1_b", "n2_g", "n2_b", "n3_g", "n3_b",
)


def decoder_layer_forward(tgt, memory, pos, query_pos, packed, nhead):
    """Sequence-first inputs (L, N, E); returns (Lq, N, E)."""
    Lq, N, E = tgt.shape
    Lk = memory.shape[0]
    dh = E // nhead

    def to2d(x, L):       # batch-major flatten so each batch is a contiguous row block
        return jnp.transpose(x, (1, 0, 2)).reshape(N * L, E)

    args = (to2d(tgt, Lq), to2d(memory, Lk), to2d(pos, Lk), to2d(query_pos, Lq))
    args = args + tuple(packed[k] for k in _PARAM_ORDER)

    kern = functools.partial(_decoder_layer_kernel, N=N, Lq=Lq, Lk=Lk, H=nhead, dh=dh)
    out2 = pl.pallas_call(
        kern,
        out_shape=jax.ShapeDtypeStruct((N * Lq, E), jnp.float32),
        grid=(1,),
        in_specs=[_whole_spec(a.shape) for a in args],
        out_specs=_whole_spec((N * Lq, E)),
        compiler_params=pltpu.CompilerParams(dimension_semantics=("arbitrary",)),
    )(*args)
    return out2.reshape(N, Lq, E).transpose(1, 0, 2)


# ---------------------------------------------------------------------------
# Parameter init (PyTorch-equivalent, stored in x @ W orientation) + packing
# ---------------------------------------------------------------------------

def _init_mha(key, E):
    ks = jax.random.split(key, 8)
    std = 0.02
    m = lambda k, s: jax.random.normal(k, s, jnp.float32) * std
    return {
        "wq": m(ks[0], (E, E)), "bq": m(ks[4], (E,)),
        "wk": m(ks[1], (E, E)), "bk": m(ks[5], (E,)),
        "wv": m(ks[2], (E, E)), "bv": m(ks[6], (E,)),
        "wo": m(ks[3], (E, E)), "bo": m(ks[7], (E,)),
    }


def init_layer_params(key, E, Dff):
    ks = jax.random.split(key, 6)
    std = 0.02
    m = lambda k, s: jax.random.normal(k, s, jnp.float32) * std
    return {
        "sa": _init_mha(ks[0], E),
        "ca": _init_mha(ks[1], E),
        "w1": m(ks[2], (E, Dff)), "b1": m(ks[4], (Dff,)),
        "w2": m(ks[3], (Dff, E)), "b2": m(ks[5], (E,)),
        "n1_g": jnp.ones((E,), jnp.float32), "n1_b": jnp.zeros((E,), jnp.float32),
        "n2_g": jnp.ones((E,), jnp.float32), "n2_b": jnp.zeros((E,), jnp.float32),
        "n3_g": jnp.ones((E,), jnp.float32), "n3_b": jnp.zeros((E,), jnp.float32),
    }


def pack_layer_params(p, nhead):
    """Fold 1/sqrt(dh) into q projections, fuse self-attn q/k, 2-D biases."""
    E = p["sa"]["wq"].shape[0]
    scale = 1.0 / math.sqrt(E // nhead)
    sa, ca = p["sa"], p["ca"]
    row = lambda b: b.reshape(1, -1)
    return {
        "sa_wqk": jnp.concatenate([sa["wq"] * scale, sa["wk"]], axis=1),
        "sa_bqk": jnp.concatenate([sa["bq"] * scale, sa["bk"]]).reshape(1, -1),
        "sa_wv": sa["wv"], "sa_bv": row(sa["bv"]),
        "sa_wo": sa["wo"], "sa_bo": row(sa["bo"]),
        "ca_wq": ca["wq"] * scale, "ca_bq": row(ca["bq"] * scale),
        "ca_wk": ca["wk"], "ca_bk": row(ca["bk"]),
        "ca_wv": ca["wv"], "ca_bv": row(ca["bv"]),
        "ca_wo": ca["wo"], "ca_bo": row(ca["bo"]),
        "w1": p["w1"], "b1": row(p["b1"]),
        "w2": p["w2"], "b2": row(p["b2"]),
        "n1_g": row(p["n1_g"]), "n1_b": row(p["n1_b"]),
        "n2_g": row(p["n2_g"]), "n2_b": row(p["n2_b"]),
        "n3_g": row(p["n3_g"]), "n3_b": row(p["n3_b"]),
    }


# ---------------------------------------------------------------------------
# Pure-JAX f32 reference (mirrors PyTorch forward_post with dropout=identity)
# ---------------------------------------------------------------------------

def _reference_decoder_layer(tgt, memory, pos, query_pos, p, nhead):
    def mha(q_in, k_in, v_in, w):
        Lq_, N_, E_ = q_in.shape
        Lk_ = k_in.shape[0]
        dh_ = E_ // nhead
        scale = 1.0 / math.sqrt(dh_)
        q = (q_in.reshape(-1, E_) @ w["wq"] + w["bq"]) * scale
        k = k_in.reshape(-1, E_) @ w["wk"] + w["bk"]
        v = v_in.reshape(-1, E_) @ w["wv"] + w["bv"]
        split = lambda x, L_: x.reshape(L_, N_, nhead, dh_).transpose(1, 2, 0, 3)
        qh, kh, vh = split(q, Lq_), split(k, Lk_), split(v, Lk_)
        s = jnp.einsum("nhqd,nhkd->nhqk", qh, kh)
        a = jax.nn.softmax(s, axis=-1)
        o = jnp.einsum("nhqk,nhkd->nhqd", a, vh)
        o = o.transpose(2, 0, 1, 3).reshape(Lq_ * N_, E_) @ w["wo"] + w["bo"]
        return o.reshape(Lq_, N_, E_)

    def ln(x, g, b):
        mu = x.mean(-1, keepdims=True)
        var = ((x - mu) ** 2).mean(-1, keepdims=True)
        return (x - mu) / jnp.sqrt(var + 1e-5) * g + b

    t = tgt
    t2 = mha(t + query_pos, t + query_pos, t, p["sa"])
    t = ln(t + t2, p["n1_g"], p["n1_b"])
    t2 = mha(t + query_pos, memory + pos, memory, p["ca"])
    t = ln(t + t2, p["n2_g"], p["n2_b"])
    h = jnp.maximum(t.reshape(-1, t.shape[-1]) @ p["w1"] + p["b1"], 0.0)
    t2 = (h @ p["w2"] + p["b2"]).reshape(t.shape)
    return ln(t + t2, p["n3_g"], p["n3_b"])


# ---------------------------------------------------------------------------

if __name__ == "__main__":
    # d_model=32, nhead=4, dim_feedforward=64, 8 queries, 16 memory tokens, batch=2
    E, H, Dff = 32, 4, 64
    Lq, Lk, N = 8, 16, 2

    key = jax.random.PRNGKey(0)
    k_in, k_params = jax.random.split(key)
    ki = jax.random.split(k_in, 4)

    tgt = jax.random.normal(ki[3], (Lq, N, E), jnp.float32) * 0.5
    memory = jax.random.normal(ki[0], (Lk, N, E), jnp.float32)
    pos = jax.random.normal(ki[1], (Lk, N, E), jnp.float32) * 0.1
    query_pos = jax.random.normal(ki[2], (Lq, N, E), jnp.float32) * 0.1

    params = init_layer_params(k_params, E, Dff)
    packed = pack_layer_params(params, H)

    out = decoder_layer_forward(tgt, memory, pos, query_pos, packed, H)
    out = jax.block_until_ready(out)

    assert out.shape == (Lq, N, E)
    assert bool(jnp.all(jnp.isfinite(out)))

    # Correctness vs. f32 reference (kernel uses bf16 MXU operands -> loose tol).
    ref = _reference_decoder_layer(tgt, memory, pos, query_pos, params, H)
    max_err = float(jnp.max(jnp.abs(out - ref)))
    assert max_err < 5e-2, f"max abs diff vs reference too large: {max_err}"

    print("KERNEL_OK")
</pallas_src>

<mosaic_0001>
module attributes {stable_mosaic.version = 11 : i64} {
  func.func @_decoder_layer_kernel(%arg0: i32, %arg1: memref<16x32xf32, #tpu.memory_space<vmem>>, %arg2: memref<32x32xf32, #tpu.memory_space<vmem>>, %arg3: memref<32x32xf32, #tpu.memory_space<vmem>>, %arg4: memref<16x32xf32, #tpu.memory_space<vmem>>, %arg5: memref<32x64xf32, #tpu.memory_space<vmem>>, %arg6: memref<1x64xf32, #tpu.memory_space<vmem>>, %arg7: memref<32x32xf32, #tpu.memory_space<vmem>>, %arg8: memref<1x32xf32, #tpu.memory_space<vmem>>, %arg9: memref<32x32xf32, #tpu.memory_space<vmem>>, %arg10: memref<1x32xf32, #tpu.memory_space<vmem>>, %arg11: memref<32x32xf32, #tpu.memory_space<vmem>>, %arg12: memref<1x32xf32, #tpu.memory_space<vmem>>, %arg13: memref<32x32xf32, #tpu.memory_space<vmem>>, %arg14: memref<1x32xf32, #tpu.memory_space<vmem>>, %arg15: memref<32x32xf32, #tpu.memory_space<vmem>>, %arg16: memref<1x32xf32, #tpu.memory_space<vmem>>, %arg17: memref<32x32xf32, #tpu.memory_space<vmem>>, %arg18: memref<1x32xf32, #tpu.memory_space<vmem>>, %arg19: memref<32x64xf32, #tpu.memory_space<vmem>>, %arg20: memref<1x64xf32, #tpu.memory_space<vmem>>, %arg21: memref<64x32xf32, #tpu.memory_space<vmem>>, %arg22: memref<1x32xf32, #tpu.memory_space<vmem>>, %arg23: memref<1x32xf32, #tpu.memory_space<vmem>>, %arg24: memref<1x32xf32, #tpu.memory_space<vmem>>, %arg25: memref<1x32xf32, #tpu.memory_space<vmem>>, %arg26: memref<1x32xf32, #tpu.memory_space<vmem>>, %arg27: memref<1x32xf32, #tpu.memory_space<vmem>>, %arg28: memref<1x32xf32, #tpu.memory_space<vmem>>, %arg29: memref<16x32xf32, #tpu.memory_space<vmem>>) attributes {dimension_semantics = [#tpu.dimension_semantics<arbitrary>], iteration_bounds = array<i64: 1>, scalar_prefetch = 0 : i64, scratch_operands = 0 : i64, tpu.core_type = #tpu.core_type<tc>, window_params = [{pipeline_mode = #tpu.pipeline_mode<synchronous>, transform_indices = @transform_0, window_bounds = array<i64: 16, 32>}, {pipeline_mode = #tpu.pipeline_mode<synchronous>, transform_indices = @transform_1, window_bounds = array<i64: 32, 32>}, {pipeline_mode = #tpu.pipeline_mode<synchronous>, transform_indices = @transform_2, window_bounds = array<i64: 32, 32>}, {pipeline_mode = #tpu.pipeline_mode<synchronous>, transform_indices = @transform_3, window_bounds = array<i64: 16, 32>}, {pipeline_mode = #tpu.pipeline_mode<synchronous>, transform_indices = @transform_4, window_bounds = array<i64: 32, 64>}, {pipeline_mode = #tpu.pipeline_mode<synchronous>, transform_indices = @transform_5, window_bounds = array<i64: 1, 64>}, {pipeline_mode = #tpu.pipeline_mode<synchronous>, transform_indices = @transform_6, window_bounds = array<i64: 32, 32>}, {pipeline_mode = #tpu.pipeline_mode<synchronous>, transform_indices = @transform_7, window_bounds = array<i64: 1, 32>}, {pipeline_mode = #tpu.pipeline_mode<synchronous>, transform_indices = @transform_8, window_bounds = array<i64: 32, 32>}, {pipeline_mode = #tpu.pipeline_mode<synchronous>, transform_indices = @transform_9, window_bounds = array<i64: 1, 32>}, {pipeline_mode = #tpu.pipeline_mode<synchronous>, transform_indices = @transform_10, window_bounds = array<i64: 32, 32>}, {pipeline_mode = #tpu.pipeline_mode<synchronous>, transform_indices = @transform_11, window_bounds = array<i64: 1, 32>}, {pipeline_mode = #tpu.pipeline_mode<synchronous>, transform_indices = @transform_12, window_bounds = array<i64: 32, 32>}, {pipeline_mode = #tpu.pipeline_mode<synchronous>, transform_indices = @transform_13, window_bounds = array<i64: 1, 32>}, {pipeline_mode = #tpu.pipeline_mode<synchronous>, transform_indices = @transform_14, window_bounds = array<i64: 32, 32>}, {pipeline_mode = #tpu.pipeline_mode<synchronous>, transform_indices = @transform_15, window_bounds = array<i64: 1, 32>}, {pipeline_mode = #tpu.pipeline_mode<synchronous>, transform_indices = @transform_16, window_bounds = array<i64: 32, 32>}, {pipeline_mode = #tpu.pipeline_mode<synchronous>, transform_indices = @transform_17, window_bounds = array<i64: 1, 32>}, {pipeline_mode = #tpu.pipeline_mode<synchronous>, transform_indices = @transform_18, window_bounds = array<i64: 32, 64>}, {pipeline_mode = #tpu.pipeline_mode<synchronous>, transform_indices = @transform_19, window_bounds = array<i64: 1, 64>}, {pipeline_mode = #tpu.pipeline_mode<synchronous>, transform_indices = @transform_20, window_bounds = array<i64: 64, 32>}, {pipeline_mode = #tpu.pipeline_mode<synchronous>, transform_indices = @transform_21, window_bounds = array<i64: 1, 32>}, {pipeline_mode = #tpu.pipeline_mode<synchronous>, transform_indices = @transform_22, window_bounds = array<i64: 1, 32>}, {pipeline_mode = #tpu.pipeline_mode<synchronous>, transform_indices = @transform_23, window_bounds = array<i64: 1, 32>}, {pipeline_mode = #tpu.pipeline_mode<synchronous>, transform_indices = @transform_24, window_bounds = array<i64: 1, 32>}, {pipeline_mode = #tpu.pipeline_mode<synchronous>, transform_indices = @transform_25, window_bounds = array<i64: 1, 32>}, {pipeline_mode = #tpu.pipeline_mode<synchronous>, transform_indices = @transform_26, window_bounds = array<i64: 1, 32>}, {pipeline_mode = #tpu.pipeline_mode<synchronous>, transform_indices = @transform_27, window_bounds = array<i64: 1, 32>}, {pipeline_mode = #tpu.pipeline_mode<synchronous>, transform_indices = @transform_28, window_bounds = array<i64: 16, 32>}]} {
    %c0 = arith.constant 0 : index
    %c0_0 = arith.constant 0 : index
    %0 = vector.load %arg1[%c0, %c0_0] : memref<16x32xf32, #tpu.memory_space<vmem>>, vector<16x32xf32>
    %c0_1 = arith.constant 0 : index
    %c0_2 = arith.constant 0 : index
    %1 = vector.load %arg4[%c0_1, %c0_2] : memref<16x32xf32, #tpu.memory_space<vmem>>, vector<16x32xf32>
    %c0_3 = arith.constant 0 : index
    %c0_4 = arith.constant 0 : index
    %2 = vector.load %arg2[%c0_3, %c0_4] : memref<32x32xf32, #tpu.memory_space<vmem>>, vector<32x32xf32>
    %3 = arith.addf %0, %1 : vector<16x32xf32>
    %c0_5 = arith.constant 0 : index
    %c0_6 = arith.constant 0 : index
    %4 = vector.load %arg5[%c0_5, %c0_6] : memref<32x64xf32, #tpu.memory_space<vmem>>, vector<32x64xf32>
    %5 = arith.truncf %3 : vector<16x32xf32> to vector<16x32xbf16>
    %6 = arith.truncf %4 : vector<32x64xf32> to vector<32x64xbf16>
    %cst = arith.constant dense<0.000000e+00> : vector<16x64xf32>
    %7 = tpu.matmul %5, %6, %cst {dimension_numbers = #tpu.dot_dimension_numbers<[1], [0], [0], [1], [0, 0, 1, 1], [], []>} : vector<16x32xbf16>, vector<32x64xbf16>, vector<16x64xf32> -> vector<16x64xf32>
    %c0_7 = arith.constant 0 : index
    %c0_8 = arith.constant 0 : index
    %8 = vector.load %arg6[%c0_7, %c0_8] : memref<1x64xf32, #tpu.memory_space<vmem>>, vector<1x64xf32>
    %9 = vector.broadcast %8 : vector<1x64xf32> to vector<16x64xf32>
    %10 = arith.addf %7, %9 : vector<16x64xf32>
    %11 = vector.extract_strided_slice %10 {offsets = [0, 0], sizes = [16, 32], strides = [1, 1]} : vector<16x64xf32> to vector<16x32xf32>
    %12 = vector.extract_strided_slice %10 {offsets = [0, 32], sizes = [16, 32], strides = [1, 1]} : vector<16x64xf32> to vector<16x32xf32>
    %c0_9 = arith.constant 0 : index
    %c0_10 = arith.constant 0 : index
    %13 = vector.load %arg7[%c0_9, %c0_10] : memref<32x32xf32, #tpu.memory_space<vmem>>, vector<32x32xf32>
    %14 = arith.truncf %0 : vector<16x32xf32> to vector<16x32xbf16>
    %15 = arith.truncf %13 : vector<32x32xf32> to vector<32x32xbf16>
    %cst_11 = arith.constant dense<0.000000e+00> : vector<16x32xf32>
    %16 = tpu.matmul %14, %15, %cst_11 {dimension_numbers = #tpu.dot_dimension_numbers<[1], [0], [0], [1], [0, 0, 1, 1], [], []>} : vector<16x32xbf16>, vector<32x32xbf16>, vector<16x32xf32> -> vector<16x32xf32>
    %c0_12 = arith.constant 0 : index
    %c0_13 = arith.constant 0 : index
    %17 = vector.load %arg8[%c0_12, %c0_13] : memref<1x32xf32, #tpu.memory_space<vmem>>, vector<1x32xf32>
    %18 = vector.broadcast %17 : vector<1x32xf32> to vector<16x32xf32>
    %19 = arith.addf %16, %18 : vector<16x32xf32>
    %20 = vector.extract_strided_slice %11 {offsets = [0, 0], sizes = [8, 32], strides = [1, 1]} : vector<16x32xf32> to vector<8x32xf32>
    %21 = vector.extract_strided_slice %12 {offsets = [0, 0], sizes = [8, 32], strides = [1, 1]} : vector<16x32xf32> to vector<8x32xf32>
    %22 = vector.extract_strided_slice %19 {offsets = [0, 0], sizes = [8, 32], strides = [1, 1]} : vector<16x32xf32> to vector<8x32xf32>
    %23 = vector.extract_strided_slice %20 {offsets = [0, 0], sizes = [8, 8], strides = [1, 1]} : vector<8x32xf32> to vector<8x8xf32>
    %24 = vector.extract_strided_slice %21 {offsets = [0, 0], sizes = [8, 8], strides = [1, 1]} : vector<8x32xf32> to vector<8x8xf32>
    %25 = vector.extract_strided_slice %22 {offsets = [0, 0], sizes = [8, 8], strides = [1, 1]} : vector<8x32xf32> to vector<8x8xf32>
    %26 = arith.truncf %23 : vector<8x8xf32> to vector<8x8xbf16>
    %27 = arith.truncf %24 : vector<8x8xf32> to vector<8x8xbf16>
    %cst_14 = arith.constant dense<0.000000e+00> : vector<8x8xf32>
    %28 = tpu.matmul %26, %27, %cst_14 {dimension_numbers = #tpu.dot_dimension_numbers<[1], [1], [0], [0], [0, 0, 1, 0], [], []>} : vector<8x8xbf16>, vector<8x8xbf16>, vector<8x8xf32> -> vector<8x8xf32>
    %cst_15 = arith.constant dense<0xFF800000> : vector<8xf32>
    %29 = vector.multi_reduction <maximumf>, %28, %cst_15 [1] : vector<8x8xf32> to vector<8xf32>
    %30 = vector.shape_cast %29 : vector<8xf32> to vector<8x1xf32>
    %31 = vector.broadcast %30 : vector<8x1xf32> to vector<8x8xf32>
    %32 = arith.subf %28, %31 : vector<8x8xf32>
    %33 = math.exp %32 : vector<8x8xf32>
    %cst_16 = arith.constant dense<0.000000e+00> : vector<8xf32>
    %34 = vector.multi_reduction <add>, %33, %cst_16 [1] : vector<8x8xf32> to vector<8xf32>
    %35 = vector.shape_cast %34 : vector<8xf32> to vector<8x1xf32>
    %36 = tpu.reciprocal %35 {approx = true} : vector<8x1xf32> -> vector<8x1xf32>
    %37 = vector.broadcast %36 : vector<8x1xf32> to vector<8x8xf32>
    %38 = arith.mulf %33, %37 : vector<8x8xf32>
    %39 = arith.truncf %38 : vector<8x8xf32> to vector<8x8xbf16>
    %40 = arith.truncf %25 : vector<8x8xf32> to vector<8x8xbf16>
    %cst_17 = arith.constant dense<0.000000e+00> : vector<8x8xf32>
    %41 = tpu.matmul %39, %40, %cst_17 {dimension_numbers = #tpu.dot_dimension_numbers<[1], [0], [0], [1], [0, 0, 1, 1], [], []>} : vector<8x8xbf16>, vector<8x8xbf16>, vector<8x8xf32> -> vector<8x8xf32>
    %42 = vector.extract_strided_slice %20 {offsets = [0, 8], sizes = [8, 8], strides = [1, 1]} : vector<8x32xf32> to vector<8x8xf32>
    %43 = vector.extract_strided_slice %21 {offsets = [0, 8], sizes = [8, 8], strides = [1, 1]} : vector<8x32xf32> to vector<8x8xf32>
    %44 = vector.extract_strided_slice %22 {offsets = [0, 8], sizes = [8, 8], strides = [1, 1]} : vector<8x32xf32> to vector<8x8xf32>
    %45 = arith.truncf %42 : vector<8x8xf32> to vector<8x8xbf16>
    %46 = arith.truncf %43 : vector<8x8xf32> to vector<8x8xbf16>
    %cst_18 = arith.constant dense<0.000000e+00> : vector<8x8xf32>
    %47 = tpu.matmul %45, %46, %cst_18 {dimension_numbers = #tpu.dot_dimension_numbers<[1], [1], [0], [0], [0, 0, 1, 0], [], []>} : vector<8x8xbf16>, vector<8x8xbf16>, vector<8x8xf32> -> vector<8x8xf32>
    %cst_19 = arith.constant dense<0xFF800000> : vector<8xf32>
    %48 = vector.multi_reduction <maximumf>, %47, %cst_19 [1] : vector<8x8xf32> to vector<8xf32>
    %49 = vector.shape_cast %48 : vector<8xf32> to vector<8x1xf32>
    %50 = vector.broadcast %49 : vector<8x1xf32> to vector<8x8xf32>
    %51 = arith.subf %47, %50 : vector<8x8xf32>
    %52 = math.exp %51 : vector<8x8xf32>
    %cst_20 = arith.constant dense<0.000000e+00> : vector<8xf32>
    %53 = vector.multi_reduction <add>, %52, %cst_20 [1] : vector<8x8xf32> to vector<8xf32>
    %54 = vector.shape_cast %53 : vector<8xf32> to vector<8x1xf32>
    %55 = tpu.reciprocal %54 {approx = true} : vector<8x1xf32> -> vector<8x1xf32>
    %56 = vector.broadcast %55 : vector<8x1xf32> to vector<8x8xf32>
    %57 = arith.mulf %52, %56 : vector<8x8xf32>
    %58 = arith.truncf %57 : vector<8x8xf32> to vector<8x8xbf16>
    %59 = arith.truncf %44 : vector<8x8xf32> to vector<8x8xbf16>
    %cst_21 = arith.constant dense<0.000000e+00> : vector<8x8xf32>
    %60 = tpu.matmul %58, %59, %cst_21 {dimension_numbers = #tpu.dot_dimension_numbers<[1], [0], [0], [1], [0, 0, 1, 1], [], []>} : vector<8x8xbf16>, vector<8x8xbf16>, vector<8x8xf32> -> vector<8x8xf32>
    %61 = vector.extract_strided_slice %20 {offsets = [0, 16], sizes = [8, 8], strides = [1, 1]} : vector<8x32xf32> to vector<8x8xf32>
    %62 = vector.extract_strided_slice %21 {offsets = [0, 16], sizes = [8, 8], strides = [1, 1]} : vector<8x32xf32> to vector<8x8xf32>
    %63 = vector.extract_strided_slice %22 {offsets = [0, 16], sizes = [8, 8], strides = [1, 1]} : vector<8x32xf32> to vector<8x8xf32>
    %64 = arith.truncf %61 : vector<8x8xf32> to vector<8x8xbf16>
    %65 = arith.truncf %62 : vector<8x8xf32> to vector<8x8xbf16>
    %cst_22 = arith.constant dense<0.000000e+00> : vector<8x8xf32>
    %66 = tpu.matmul %64, %65, %cst_22 {dimension_numbers = #tpu.dot_dimension_numbers<[1], [1], [0], [0], [0, 0, 1, 0], [], []>} : vector<8x8xbf16>, vector<8x8xbf16>, vector<8x8xf32> -> vector<8x8xf32>
    %cst_23 = arith.constant dense<0xFF800000> : vector<8xf32>
    %67 = vector.multi_reduction <maximumf>, %66, %cst_23 [1] : vector<8x8xf32> to vector<8xf32>
    %68 = vector.shape_cast %67 : vector<8xf32> to vector<8x1xf32>
    %69 = vector.broadcast %68 : vector<8x1xf32> to vector<8x8xf32>
    %70 = arith.subf %66, %69 : vector<8x8xf32>
    %71 = math.exp %70 : vector<8x8xf32>
    %cst_24 = arith.constant dense<0.000000e+00> : vector<8xf32>
    %72 = vector.multi_reduction <add>, %71, %cst_24 [1] : vector<8x8xf32> to vector<8xf32>
    %73 = vector.shape_cast %72 : vector<8xf32> to vector<8x1xf32>
    %74 = tpu.reciprocal %73 {approx = true} : vector<8x1xf32> -> vector<8x1xf32>
    %75 = vector.broadcast %74 : vector<8x1xf32> to vector<8x8xf32>
    %76 = arith.mulf %71, %75 : vector<8x8xf32>
    %77 = arith.truncf %76 : vector<8x8xf32> to vector<8x8xbf16>
    %78 = arith.truncf %63 : vector<8x8xf32> to vector<8x8xbf16>
    %cst_25 = arith.constant dense<0.000000e+00> : vector<8x8xf32>
    %79 = tpu.matmul %77, %78, %cst_25 {dimension_numbers = #tpu.dot_dimension_numbers<[1], [0], [0], [1], [0, 0, 1, 1], [], []>} : vector<8x8xbf16>, vector<8x8xbf16>, vector<8x8xf32> -> vector<8x8xf32>
    %80 = vector.extract_strided_slice %20 {offsets = [0, 24], sizes = [8, 8], strides = [1, 1]} : vector<8x32xf32> to vector<8x8xf32>
    %81 = vector.extract_strided_slice %21 {offsets = [0, 24], sizes = [8, 8], strides = [1, 1]} : vector<8x32xf32> to vector<8x8xf32>
    %82 = vector.extract_strided_slice %22 {offsets = [0, 24], sizes = [8, 8], strides = [1, 1]} : vector<8x32xf32> to vector<8x8xf32>
    %83 = arith.truncf %80 : vector<8x8xf32> to vector<8x8xbf16>
    %84 = arith.truncf %81 : vector<8x8xf32> to vector<8x8xbf16>
    %cst_26 = arith.constant dense<0.000000e+00> : vector<8x8xf32>
    %85 = tpu.matmul %83, %84, %cst_26 {dimension_numbers = #tpu.dot_dimension_numbers<[1], [1], [0], [0], [0, 0, 1, 0], [], []>} : vector<8x8xbf16>, vector<8x8xbf16>, vector<8x8xf32> -> vector<8x8xf32>
    %cst_27 = arith.constant dense<0xFF800000> : vector<8xf32>
    %86 = vector.multi_reduction <maximumf>, %85, %cst_27 [1] : vector<8x8xf32> to vector<8xf32>
    %87 = vector.shape_cast %86 : vector<8xf32> to vector<8x1xf32>
    %88 = vector.broadcast %87 : vector<8x1xf32> to vector<8x8xf32>
    %89 = arith.subf %85, %88 : vector<8x8xf32>
    %90 = math.exp %89 : vector<8x8xf32>
    %cst_28 = arith.constant dense<0.000000e+00> : vector<8xf32>
    %91 = vector.multi_reduction <add>, %90, %cst_28 [1] : vector<8x8xf32> to vector<8xf32>
    %92 = vector.shape_cast %91 : vector<8xf32> to vector<8x1xf32>
    %93 = tpu.reciprocal %92 {approx = true} : vector<8x1xf32> -> vector<8x1xf32>
    %94 = vector.broadcast %93 : vector<8x1xf32> to vector<8x8xf32>
    %95 = arith.mulf %90, %94 : vector<8x8xf32>
    %96 = arith.truncf %95 : vector<8x8xf32> to vector<8x8xbf16>
    %97 = arith.truncf %82 : vector<8x8xf32> to vector<8x8xbf16>
    %cst_29 = arith.constant dense<0.000000e+00> : vector<8x8xf32>
    %98 = tpu.matmul %96, %97, %cst_29 {dimension_numbers = #tpu.dot_dimension_numbers<[1], [0], [0], [1], [0, 0, 1, 1], [], []>} : vector<8x8xbf16>, vector<8x8xbf16>, vector<8x8xf32> -> vector<8x8xf32>
    %99 = tpu.concatenate %41, %60, %79, %98 in 1 : vector<8x8xf32>, vector<8x8xf32>, vector<8x8xf32>, vector<8x8xf32> -> vector<8x32xf32>
    %100 = vector.extract_strided_slice %11 {offsets = [8, 0], sizes = [8, 32], strides = [1, 1]} : vector<16x32xf32> to vector<8x32xf32>
    %101 = vector.extract_strided_slice %12 {offsets = [8, 0], sizes = [8, 32], strides = [1, 1]} : vector<16x32xf32> to vector<8x32xf32>
    %102 = vector.extract_strided_slice %19 {offsets = [8, 0], sizes = [8, 32], strides = [1, 1]} : vector<16x32xf32> to vector<8x32xf32>
    %103 = vector.extract_strided_slice %100 {offsets = [0, 0], sizes = [8, 8], strides = [1, 1]} : vector<8x32xf32> to vector<8x8xf32>
    %104 = vector.extract_strided_slice %101 {offsets = [0, 0], sizes = [8, 8], strides = [1, 1]} : vector<8x32xf32> to vector<8x8xf32>
    %105 = vector.extract_strided_slice %102 {offsets = [0, 0], sizes = [8, 8], strides = [1, 1]} : vector<8x32xf32> to vector<8x8xf32>
    %106 = arith.truncf %103 : vector<8x8xf32> to vector<8x8xbf16>
    %107 = arith.truncf %104 : vector<8x8xf32> to vector<8x8xbf16>
    %cst_30 = arith.constant dense<0.000000e+00> : vector<8x8xf32>
    %108 = tpu.matmul %106, %107, %cst_30 {dimension_numbers = #tpu.dot_dimension_numbers<[1], [1], [0], [0], [0, 0, 1, 0], [], []>} : vector<8x8xbf16>, vector<8x8xbf16>, vector<8x8xf32> -> vector<8x8xf32>
    %cst_31 = arith.constant dense<0xFF800000> : vector<8xf32>
    %109 = vector.multi_reduction <maximumf>, %108, %cst_31 [1] : vector<8x8xf32> to vector<8xf32>
    %110 = vector.shape_cast %109 : vector<8xf32> to vector<8x1xf32>
    %111 = vector.broadcast %110 : vector<8x1xf32> to vector<8x8xf32>
    %112 = arith.subf %108, %111 : vector<8x8xf32>
    %113 = math.exp %112 : vector<8x8xf32>
    %cst_32 = arith.constant dense<0.000000e+00> : vector<8xf32>
    %114 = vector.multi_reduction <add>, %113, %cst_32 [1] : vector<8x8xf32> to vector<8xf32>
    %115 = vector.shape_cast %114 : vector<8xf32> to vector<8x1xf32>
    %116 = tpu.reciprocal %115 {approx = true} : vector<8x1xf32> -> vector<8x1xf32>
    %117 = vector.broadcast %116 : vector<8x1xf32> to vector<8x8xf32>
    %118 = arith.mulf %113, %117 : vector<8x8xf32>
    %119 = arith.truncf %118 : vector<8x8xf32> to vector<8x8xbf16>
    %120 = arith.truncf %105 : vector<8x8xf32> to vector<8x8xbf16>
    %cst_33 = arith.constant dense<0.000000e+00> : vector<8x8xf32>
    %121 = tpu.matmul %119, %120, %cst_33 {dimension_numbers = #tpu.dot_dimension_numbers<[1], [0], [0], [1], [0, 0, 1, 1], [], []>} : vector<8x8xbf16>, vector<8x8xbf16>, vector<8x8xf32> -> vector<8x8xf32>
    %122 = vector.extract_strided_slice %100 {offsets = [0, 8], sizes = [8, 8], strides = [1, 1]} : vector<8x32xf32> to vector<8x8xf32>
    %123 = vector.extract_strided_slice %101 {offsets = [0, 8], sizes = [8, 8], strides = [1, 1]} : vector<8x32xf32> to vector<8x8xf32>
    %124 = vector.extract_strided_slice %102 {offsets = [0, 8], sizes = [8, 8], strides = [1, 1]} : vector<8x32xf32> to vector<8x8xf32>
    %125 = arith.truncf %122 : vector<8x8xf32> to vector<8x8xbf16>
    %126 = arith.truncf %123 : vector<8x8xf32> to vector<8x8xbf16>
    %cst_34 = arith.constant dense<0.000000e+00> : vector<8x8xf32>
    %127 = tpu.matmul %125, %126, %cst_34 {dimension_numbers = #tpu.dot_dimension_numbers<[1], [1], [0], [0], [0, 0, 1, 0], [], []>} : vector<8x8xbf16>, vector<8x8xbf16>, vector<8x8xf32> -> vector<8x8xf32>
    %cst_35 = arith.constant dense<0xFF800000> : vector<8xf32>
    %128 = vector.multi_reduction <maximumf>, %127, %cst_35 [1] : vector<8x8xf32> to vector<8xf32>
    %129 = vector.shape_cast %128 : vector<8xf32> to vector<8x1xf32>
    %130 = vector.broadcast %129 : vector<8x1xf32> to vector<8x8xf32>
    %131 = arith.subf %127, %130 : vector<8x8xf32>
    %132 = math.exp %131 : vector<8x8xf32>
    %cst_36 = arith.constant dense<0.000000e+00> : vector<8xf32>
    %133 = vector.multi_reduction <add>, %132, %cst_36 [1] : vector<8x8xf32> to vector<8xf32>
    %134 = vector.shape_cast %133 : vector<8xf32> to vector<8x1xf32>
    %135 = tpu.reciprocal %134 {approx = true} : vector<8x1xf32> -> vector<8x1xf32>
    %136 = vector.broadcast %135 : vector<8x1xf32> to vector<8x8xf32>
    %137 = arith.mulf %132, %136 : vector<8x8xf32>
    %138 = arith.truncf %137 : vector<8x8xf32> to vector<8x8xbf16>
    %139 = arith.truncf %124 : vector<8x8xf32> to vector<8x8xbf16>
    %cst_37 = arith.constant dense<0.000000e+00> : vector<8x8xf32>
    %140 = tpu.matmul %138, %139, %cst_37 {dimension_numbers = #tpu.dot_dimension_numbers<[1], [0], [0], [1], [0, 0, 1, 1], [], []>} : vector<8x8xbf16>, vector<8x8xbf16>, vector<8x8xf32> -> vector<8x8xf32>
    %141 = vector.extract_strided_slice %100 {offsets = [0, 16], sizes = [8, 8], strides = [1, 1]} : vector<8x32xf32> to vector<8x8xf32>
    %142 = vector.extract_strided_slice %101 {offsets = [0, 16], sizes = [8, 8], strides = [1, 1]} : vector<8x32xf32> to vector<8x8xf32>
    %143 = vector.extract_strided_slice %102 {offsets = [0, 16], sizes = [8, 8], strides = [1, 1]} : vector<8x32xf32> to vector<8x8xf32>
    %144 = arith.truncf %141 : vector<8x8xf32> to vector<8x8xbf16>
    %145 = arith.truncf %142 : vector<8x8xf32> to vector<8x8xbf16>
    %cst_38 = arith.constant dense<0.000000e+00> : vector<8x8xf32>
    %146 = tpu.matmul %144, %145, %cst_38 {dimension_numbers = #tpu.dot_dimension_numbers<[1], [1], [0], [0], [0, 0, 1, 0], [], []>} : vector<8x8xbf16>, vector<8x8xbf16>, vector<8x8xf32> -> vector<8x8xf32>
    %cst_39 = arith.constant dense<0xFF800000> : vector<8xf32>
    %147 = vector.multi_reduction <maximumf>, %146, %cst_39 [1] : vector<8x8xf32> to vector<8xf32>
    %148 = vector.shape_cast %147 : vector<8xf32> to vector<8x1xf32>
    %149 = vector.broadcast %148 : vector<8x1xf32> to vector<8x8xf32>
    %150 = arith.subf %146, %149 : vector<8x8xf32>
    %151 = math.exp %150 : vector<8x8xf32>
    %cst_40 = arith.constant dense<0.000000e+00> : vector<8xf32>
    %152 = vector.multi_reduction <add>, %151, %cst_40 [1] : vector<8x8xf32> to vector<8xf32>
    %153 = vector.shape_cast %152 : vector<8xf32> to vector<8x1xf32>
    %154 = tpu.reciprocal %153 {approx = true} : vector<8x1xf32> -> vector<8x1xf32>
    %155 = vector.broadcast %154 : vector<8x1xf32> to vector<8x8xf32>
    %156 = arith.mulf %151, %155 : vector<8x8xf32>
    %157 = arith.truncf %156 : vector<8x8xf32> to vector<8x8xbf16>
    %158 = arith.truncf %143 : vector<8x8xf32> to vector<8x8xbf16>
    %cst_41 = arith.constant dense<0.000000e+00> : vector<8x8xf32>
    %159 = tpu.matmul %157, %158, %cst_41 {dimension_numbers = #tpu.dot_dimension_numbers<[1], [0], [0], [1], [0, 0, 1, 1], [], []>} : vector<8x8xbf16>, vector<8x8xbf16>, vector<8x8xf32> -> vector<8x8xf32>
    %160 = vector.extract_strided_slice %100 {offsets = [0, 24], sizes = [8, 8], strides = [1, 1]} : vector<8x32xf32> to vector<8x8xf32>
    %161 = vector.extract_strided_slice %101 {offsets = [0, 24], sizes = [8, 8], strides = [1, 1]} : vector<8x32xf32> to vector<8x8xf32>
    %162 = vector.extract_strided_slice %102 {offsets = [0, 24], sizes = [8, 8], strides = [1, 1]} : vector<8x32xf32> to vector<8x8xf32>
    %163 = arith.truncf %160 : vector<8x8xf32> to vector<8x8xbf16>
    %164 = arith.truncf %161 : vector<8x8xf32> to vector<8x8xbf16>
    %cst_42 = arith.constant dense<0.000000e+00> : vector<8x8xf32>
    %165 = tpu.matmul %163, %164, %cst_42 {dimension_numbers = #tpu.dot_dimension_numbers<[1], [1], [0], [0], [0, 0, 1, 0], [], []>} : vector<8x8xbf16>, vector<8x8xbf16>, vector<8x8xf32> -> vector<8x8xf32>
    %cst_43 = arith.constant dense<0xFF800000> : vector<8xf32>
    %166 = vector.multi_reduction <maximumf>, %165, %cst_43 [1] : vector<8x8xf32> to vector<8xf32>
    %167 = vector.shape_cast %166 : vector<8xf32> to vector<8x1xf32>
    %168 = vector.broadcast %167 : vector<8x1xf32> to vector<8x8xf32>
    %169 = arith.subf %165, %168 : vector<8x8xf32>
    %170 = math.exp %169 : vector<8x8xf32>
    %cst_44 = arith.constant dense<0.000000e+00> : vector<8xf32>
    %171 = vector.multi_reduction <add>, %170, %cst_44 [1] : vector<8x8xf32> to vector<8xf32>
    %172 = vector.shape_cast %171 : vector<8xf32> to vector<8x1xf32>
    %173 = tpu.reciprocal %172 {approx = true} : vector<8x1xf32> -> vector<8x1xf32>
    %174 = vector.broadcast %173 : vector<8x1xf32> to vector<8x8xf32>
    %175 = arith.mulf %170, %174 : vector<8x8xf32>
    %176 = arith.truncf %175 : vector<8x8xf32> to vector<8x8xbf16>
    %177 = arith.truncf %162 : vector<8x8xf32> to vector<8x8xbf16>
    %cst_45 = arith.constant dense<0.000000e+00> : vector<8x8xf32>
    %178 = tpu.matmul %176, %177, %cst_45 {dimension_numbers = #tpu.dot_dimension_numbers<[1], [0], [0], [1], [0, 0, 1, 1], [], []>} : vector<8x8xbf16>, vector<8x8xbf16>, vector<8x8xf32> -> vector<8x8xf32>
    %179 = tpu.concatenate %121, %140, %159, %178 in 1 : vector<8x8xf32>, vector<8x8xf32>, vector<8x8xf32>, vector<8x8xf32> -> vector<8x32xf32>
    %180 = tpu.concatenate %99, %179 in 0 : vector<8x32xf32>, vector<8x32xf32> -> vector<16x32xf32>
    %c0_46 = arith.constant 0 : index
    %c0_47 = arith.constant 0 : index
    %181 = vector.load %arg9[%c0_46, %c0_47] : memref<32x32xf32, #tpu.memory_space<vmem>>, vector<32x32xf32>
    %182 = arith.truncf %180 : vector<16x32xf32> to vector<16x32xbf16>
    %183 = arith.truncf %181 : vector<32x32xf32> to vector<32x32xbf16>
    %cst_48 = arith.constant dense<0.000000e+00> : vector<16x32xf32>
    %184 = tpu.matmul %182, %183, %cst_48 {dimension_numbers = #tpu.dot_dimension_numbers<[1], [0], [0], [1], [0, 0, 1, 1], [], []>} : vector<16x32xbf16>, vector<32x32xbf16>, vector<16x32xf32> -> vector<16x32xf32>
    %c0_49 = arith.constant 0 : index
    %c0_50 = arith.constant 0 : index
    %185 = vector.load %arg10[%c0_49, %c0_50] : memref<1x32xf32, #tpu.memory_space<vmem>>, vector<1x32xf32>
    %186 = vector.broadcast %185 : vector<1x32xf32> to vector<16x32xf32>
    %187 = arith.addf %184, %186 : vector<16x32xf32>
    %188 = arith.addf %0, %187 : vector<16x32xf32>
    %c0_51 = arith.constant 0 : index
    %c0_52 = arith.constant 0 : index
    %189 = vector.load %arg23[%c0_51, %c0_52] : memref<1x32xf32, #tpu.memory_space<vmem>>, vector<1x32xf32>
    %c0_53 = arith.constant 0 : index
    %c0_54 = arith.constant 0 : index
    %190 = vector.load %arg24[%c0_53, %c0_54] : memref<1x32xf32, #tpu.memory_space<vmem>>, vector<1x32xf32>
    %cst_55 = arith.constant dense<0.000000e+00> : vector<16xf32>
    %191 = vector.multi_reduction <add>, %188, %cst_55 [1] : vector<16x32xf32> to vector<16xf32>
    %192 = vector.shape_cast %191 : vector<16xf32> to vector<16x1xf32>
    %cst_56 = arith.constant 3.200000e+01 : f32
    %193 = vector.broadcast %cst_56 : f32 to vector<16x1xf32>
    %194 = arith.divf %192, %193 : vector<16x1xf32>
    %195 = vector.broadcast %194 : vector<16x1xf32> to vector<16x32xf32>
    %196 = arith.subf %188, %195 : vector<16x32xf32>
    %197 = arith.mulf %196, %196 : vector<16x32xf32>
    %cst_57 = arith.constant dense<0.000000e+00> : vector<16xf32>
    %198 = vector.multi_reduction <add>, %197, %cst_57 [1] : vector<16x32xf32> to vector<16xf32>
    %199 = vector.shape_cast %198 : vector<16xf32> to vector<16x1xf32>
    %cst_58 = arith.constant 3.200000e+01 : f32
    %200 = vector.broadcast %cst_58 : f32 to vector<16x1xf32>
    %201 = arith.divf %199, %200 : vector<16x1xf32>
    %202 = vector.broadcast %194 : vector<16x1xf32> to vector<16x32xf32>
    %203 = arith.subf %188, %202 : vector<16x32xf32>
    %cst_59 = arith.constant 9.99999974E-6 : f32
    %204 = vector.broadcast %cst_59 : f32 to vector<16x1xf32>
    %205 = arith.addf %201, %204 : vector<16x1xf32>
    %206 = math.rsqrt %205 : vector<16x1xf32>
    %207 = vector.broadcast %206 : vector<16x1xf32> to vector<16x32xf32>
    %208 = arith.mulf %203, %207 : vector<16x32xf32>
    %209 = vector.broadcast %189 : vector<1x32xf32> to vector<16x32xf32>
    %210 = arith.mulf %208, %209 : vector<16x32xf32>
    %211 = vector.broadcast %190 : vector<1x32xf32> to vector<16x32xf32>
    %212 = arith.addf %210, %211 : vector<16x32xf32>
    %213 = arith.addf %212, %1 : vector<16x32xf32>
    %c0_60 = arith.constant 0 : index
    %c0_61 = arith.constant 0 : index
    %214 = vector.load %arg11[%c0_60, %c0_61] : memref<32x32xf32, #tpu.memory_space<vmem>>, vector<32x32xf32>
    %215 = arith.truncf %213 : vector<16x32xf32> to vector<16x32xbf16>
    %216 = arith.truncf %214 : vector<32x32xf32> to vector<32x32xbf16>
    %cst_62 = arith.constant dense<0.000000e+00> : vector<16x32xf32>
    %217 = tpu.matmul %215, %216, %cst_62 {dimension_numbers = #tpu.dot_dimension_numbers<[1], [0], [0], [1], [0, 0, 1, 1], [], []>} : vector<16x32xbf16>, vector<32x32xbf16>, vector<16x32xf32> -> vector<16x32xf32>
    %c0_63 = arith.constant 0 : index
    %c0_64 = arith.constant 0 : index
    %218 = vector.load %arg12[%c0_63, %c0_64] : memref<1x32xf32, #tpu.memory_space<vmem>>, vector<1x32xf32>
    %219 = vector.broadcast %218 : vector<1x32xf32> to vector<16x32xf32>
    %220 = arith.addf %217, %219 : vector<16x32xf32>
    %c0_65 = arith.constant 0 : index
    %c0_66 = arith.constant 0 : index
    %221 = vector.load %arg3[%c0_65, %c0_66] : memref<32x32xf32, #tpu.memory_space<vmem>>, vector<32x32xf32>
    %222 = arith.addf %2, %221 : vector<32x32xf32>
    %c0_67 = arith.constant 0 : index
    %c0_68 = arith.constant 0 : index
    %223 = vector.load %arg13[%c0_67, %c0_68] : memref<32x32xf32, #tpu.memory_space<vmem>>, vector<32x32xf32>
    %224 = arith.truncf %222 : vector<32x32xf32> to vector<32x32xbf16>
    %225 = arith.truncf %223 : vector<32x32xf32> to vector<32x32xbf16>
    %cst_69 = arith.constant dense<0.000000e+00> : vector<32x32xf32>
    %226 = tpu.matmul %224, %225, %cst_69 {dimension_numbers = #tpu.dot_dimension_numbers<[1], [0], [0], [1], [0, 0, 1, 1], [], []>} : vector<32x32xbf16>, vector<32x32xbf16>, vector<32x32xf32> -> vector<32x32xf32>
    %c0_70 = arith.constant 0 : index
    %c0_71 = arith.constant 0 : index
    %227 = vector.load %arg14[%c0_70, %c0_71] : memref<1x32xf32, #tpu.memory_space<vmem>>, vector<1x32xf32>
    %228 = vector.broadcast %227 : vector<1x32xf32> to vector<32x32xf32>
    %229 = arith.addf %226, %228 : vector<32x32xf32>
    %c0_72 = arith.constant 0 : index
    %c0_73 = arith.constant 0 : index
    %230 = vector.load %arg15[%c0_72, %c0_73] : memref<32x32xf32, #tpu.memory_space<vmem>>, vector<32x32xf32>
    %231 = arith.truncf %2 : vector<32x32xf32> to vector<32x32xbf16>
    %232 = arith.truncf %230 : vector<32x32xf32> to vector<32x32xbf16>
    %cst_74 = arith.constant dense<0.000000e+00> : vector<32x32xf32>
    %233 = tpu.matmul %231, %232, %cst_74 {dimension_numbers = #tpu.dot_dimension_numbers<[1], [0], [0], [1], [0, 0, 1, 1], [], []>} : vector<32x32xbf16>, vector<32x32xbf16>, vector<32x32xf32> -> vector<32x32xf32>
    %c0_75 = arith.constant 0 : index
    %c0_76 = arith.constant 0 : index
    %234 = vector.load %arg16[%c0_75, %c0_76] : memref<1x32xf32, #tpu.memory_space<vmem>>, vector<1x32xf32>
    %235 = vector.broadcast %234 : vector<1x32xf32> to vector<32x32xf32>
    %236 = arith.addf %233, %235 : vector<32x32xf32>
    %237 = vector.extract_strided_slice %220 {offsets = [0, 0], sizes = [8, 32], strides = [1, 1]} : vector<16x32xf32> to vector<8x32xf32>
    %238 = vector.extract_strided_slice %229 {offsets = [0, 0], sizes = [16, 32], strides = [1, 1]} : vector<32x32xf32> to vector<16x32xf32>
    %239 = vector.extract_strided_slice %236 {offsets = [0, 0], sizes = [16, 32], strides = [1, 1]} : vector<32x32xf32> to vector<16x32xf32>
    %240 = vector.extract_strided_slice %237 {offsets = [0, 0], sizes = [8, 8], strides = [1, 1]} : vector<8x32xf32> to vector<8x8xf32>
    %241 = vector.extract_strided_slice %238 {offsets = [0, 0], sizes = [16, 8], strides = [1, 1]} : vector<16x32xf32> to vector<16x8xf32>
    %242 = vector.extract_strided_slice %239 {offsets = [0, 0], sizes = [16, 8], strides = [1, 1]} : vector<16x32xf32> to vector<16x8xf32>
    %243 = arith.truncf %240 : vector<8x8xf32> to vector<8x8xbf16>
    %244 = arith.truncf %241 : vector<16x8xf32> to vector<16x8xbf16>
    %cst_77 = arith.constant dense<0.000000e+00> : vector<8x16xf32>
    %245 = tpu.matmul %243, %244, %cst_77 {dimension_numbers = #tpu.dot_dimension_numbers<[1], [1], [0], [0], [0, 0, 1, 0], [], []>} : vector<8x8xbf16>, vector<16x8xbf16>, vector<8x16xf32> -> vector<8x16xf32>
    %cst_78 = arith.constant dense<0xFF800000> : vector<8xf32>
    %246 = vector.multi_reduction <maximumf>, %245, %cst_78 [1] : vector<8x16xf32> to vector<8xf32>
    %247 = vector.shape_cast %246 : vector<8xf32> to vector<8x1xf32>
    %248 = vector.broadcast %247 : vector<8x1xf32> to vector<8x16xf32>
    %249 = arith.subf %245, %248 : vector<8x16xf32>
    %250 = math.exp %249 : vector<8x16xf32>
    %cst_79 = arith.constant dense<0.000000e+00> : vector<8xf32>
    %251 = vector.multi_reduction <add>, %250, %cst_79 [1] : vector<8x16xf32> to vector<8xf32>
    %252 = vector.shape_cast %251 : vector<8xf32> to vector<8x1xf32>
    %253 = tpu.reciprocal %252 {approx = true} : vector<8x1xf32> -> vector<8x1xf32>
    %254 = vector.broadcast %253 : vector<8x1xf32> to vector<8x16xf32>
    %255 = arith.mulf %250, %254 : vector<8x16xf32>
    %256 = arith.truncf %255 : vector<8x16xf32> to vector<8x16xbf16>
    %257 = arith.truncf %242 : vector<16x8xf32> to vector<16x8xbf16>
    %cst_80 = arith.constant dense<0.000000e+00> : vector<8x8xf32>
    %258 = tpu.matmul %256, %257, %cst_80 {dimension_numbers = #tpu.dot_dimension_numbers<[1], [0], [0], [1], [0, 0, 1, 1], [], []>} : vector<8x16xbf16>, vector<16x8xbf16>, vector<8x8xf32> -> vector<8x8xf32>
    %259 = vector.extract_strided_slice %237 {offsets = [0, 8], sizes = [8, 8], strides = [1, 1]} : vector<8x32xf32> to vector<8x8xf32>
    %260 = vector.extract_strided_slice %238 {offsets = [0, 8], sizes = [16, 8], strides = [1, 1]} : vector<16x32xf32> to vector<16x8xf32>
    %261 = vector.extract_strided_slice %239 {offsets = [0, 8], sizes = [16, 8], strides = [1, 1]} : vector<16x32xf32> to vector<16x8xf32>
    %262 = arith.truncf %259 : vector<8x8xf32> to vector<8x8xbf16>
    %263 = arith.truncf %260 : vector<16x8xf32> to vector<16x8xbf16>
    %cst_81 = arith.constant dense<0.000000e+00> : vector<8x16xf32>
    %264 = tpu.matmul %262, %263, %cst_81 {dimension_numbers = #tpu.dot_dimension_numbers<[1], [1], [0], [0], [0, 0, 1, 0], [], []>} : vector<8x8xbf16>, vector<16x8xbf16>, vector<8x16xf32> -> vector<8x16xf32>
    %cst_82 = arith.constant dense<0xFF800000> : vector<8xf32>
    %265 = vector.multi_reduction <maximumf>, %264, %cst_82 [1] : vector<8x16xf32> to vector<8xf32>
    %266 = vector.shape_cast %265 : vector<8xf32> to vector<8x1xf32>
    %267 = vector.broadcast %266 : vector<8x1xf32> to vector<8x16xf32>
    %268 = arith.subf %264, %267 : vector<8x16xf32>
    %269 = math.exp %268 : vector<8x16xf32>
    %cst_83 = arith.constant dense<0.000000e+00> : vector<8xf32>
    %270 = vector.multi_reduction <add>, %269, %cst_83 [1] : vector<8x16xf32> to vector<8xf32>
    %271 = vector.shape_cast %270 : vector<8xf32> to vector<8x1xf32>
    %272 = tpu.reciprocal %271 {approx = true} : vector<8x1xf32> -> vector<8x1xf32>
    %273 = vector.broadcast %272 : vector<8x1xf32> to vector<8x16xf32>
    %274 = arith.mulf %269, %273 : vector<8x16xf32>
    %275 = arith.truncf %274 : vector<8x16xf32> to vector<8x16xbf16>
    %276 = arith.truncf %261 : vector<16x8xf32> to vector<16x8xbf16>
    %cst_84 = arith.constant dense<0.000000e+00> : vector<8x8xf32>
    %277 = tpu.matmul %275, %276, %cst_84 {dimension_numbers = #tpu.dot_dimension_numbers<[1], [0], [0], [1], [0, 0, 1, 1], [], []>} : vector<8x16xbf16>, vector<16x8xbf16>, vector<8x8xf32> -> vector<8x8xf32>
    %278 = vector.extract_strided_slice %237 {offsets = [0, 16], sizes = [8, 8], strides = [1, 1]} : vector<8x32xf32> to vector<8x8xf32>
    %279 = vector.extract_strided_slice %238 {offsets = [0, 16], sizes = [16, 8], strides = [1, 1]} : vector<16x32xf32> to vector<16x8xf32>
    %280 = vector.extract_strided_slice %239 {offsets = [0, 16], sizes = [16, 8], strides = [1, 1]} : vector<16x32xf32> to vector<16x8xf32>
    %281 = arith.truncf %278 : vector<8x8xf32> to vector<8x8xbf16>
    %282 = arith.truncf %279 : vector<16x8xf32> to vector<16x8xbf16>
    %cst_85 = arith.constant dense<0.000000e+00> : vector<8x16xf32>
    %283 = tpu.matmul %281, %282, %cst_85 {dimension_numbers = #tpu.dot_dimension_numbers<[1], [1], [0], [0], [0, 0, 1, 0], [], []>} : vector<8x8xbf16>, vector<16x8xbf16>, vector<8x16xf32> -> vector<8x16xf32>
    %cst_86 = arith.constant dense<0xFF800000> : vector<8xf32>
    %284 = vector.multi_reduction <maximumf>, %283, %cst_86 [1] : vector<8x16xf32> to vector<8xf32>
    %285 = vector.shape_cast %284 : vector<8xf32> to vector<8x1xf32>
    %286 = vector.broadcast %285 : vector<8x1xf32> to vector<8x16xf32>
    %287 = arith.subf %283, %286 : vector<8x16xf32>
    %288 = math.exp %287 : vector<8x16xf32>
    %cst_87 = arith.constant dense<0.000000e+00> : vector<8xf32>
    %289 = vector.multi_reduction <add>, %288, %cst_87 [1] : vector<8x16xf32> to vector<8xf32>
    %290 = vector.shape_cast %289 : vector<8xf32> to vector<8x1xf32>
    %291 = tpu.reciprocal %290 {approx = true} : vector<8x1xf32> -> vector<8x1xf32>
    %292 = vector.broadcast %291 : vector<8x1xf32> to vector<8x16xf32>
    %293 = arith.mulf %288, %292 : vector<8x16xf32>
    %294 = arith.truncf %293 : vector<8x16xf32> to vector<8x16xbf16>
    %295 = arith.truncf %280 : vector<16x8xf32> to vector<16x8xbf16>
    %cst_88 = arith.constant dense<0.000000e+00> : vector<8x8xf32>
    %296 = tpu.matmul %294, %295, %cst_88 {dimension_numbers = #tpu.dot_dimension_numbers<[1], [0], [0], [1], [0, 0, 1, 1], [], []>} : vector<8x16xbf16>, vector<16x8xbf16>, vector<8x8xf32> -> vector<8x8xf32>
    %297 = vector.extract_strided_slice %237 {offsets = [0, 24], sizes = [8, 8], strides = [1, 1]} : vector<8x32xf32> to vector<8x8xf32>
    %298 = vector.extract_strided_slice %238 {offsets = [0, 24], sizes = [16, 8], strides = [1, 1]} : vector<16x32xf32> to vector<16x8xf32>
    %299 = vector.extract_strided_slice %239 {offsets = [0, 24], sizes = [16, 8], strides = [1, 1]} : vector<16x32xf32> to vector<16x8xf32>
    %300 = arith.truncf %297 : vector<8x8xf32> to vector<8x8xbf16>
    %301 = arith.truncf %298 : vector<16x8xf32> to vector<16x8xbf16>
    %cst_89 = arith.constant dense<0.000000e+00> : vector<8x16xf32>
    %302 = tpu.matmul %300, %301, %cst_89 {dimension_numbers = #tpu.dot_dimension_numbers<[1], [1], [0], [0], [0, 0, 1, 0], [], []>} : vector<8x8xbf16>, vector<16x8xbf16>, vector<8x16xf32> -> vector<8x16xf32>
    %cst_90 = arith.constant dense<0xFF800000> : vector<8xf32>
    %303 = vector.multi_reduction <maximumf>, %302, %cst_90 [1] : vector<8x16xf32> to vector<8xf32>
    %304 = vector.shape_cast %303 : vector<8xf32> to vector<8x1xf32>
    %305 = vector.broadcast %304 : vector<8x1xf32> to vector<8x16xf32>
    %306 = arith.subf %302, %305 : vector<8x16xf32>
    %307 = math.exp %306 : vector<8x16xf32>
    %cst_91 = arith.constant dense<0.000000e+00> : vector<8xf32>
    %308 = vector.multi_reduction <add>, %307, %cst_91 [1] : vector<8x16xf32> to vector<8xf32>
    %309 = vector.shape_cast %308 : vector<8xf32> to vector<8x1xf32>
    %310 = tpu.reciprocal %309 {approx = true} : vector<8x1xf32> -> vector<8x1xf32>
    %311 = vector.broadcast %310 : vector<8x1xf32> to vector<8x16xf32>
    %312 = arith.mulf %307, %311 : vector<8x16xf32>
    %313 = arith.truncf %312 : vector<8x16xf32> to vector<8x16xbf16>
    %314 = arith.truncf %299 : vector<16x8xf32> to vector<16x8xbf16>
    %cst_92 = arith.constant dense<0.000000e+00> : vector<8x8xf32>
    %315 = tpu.matmul %313, %314, %cst_92 {dimension_numbers = #tpu.dot_dimension_numbers<[1], [0], [0], [1], [0, 0, 1, 1], [], []>} : vector<8x16xbf16>, vector<16x8xbf16>, vector<8x8xf32> -> vector<8x8xf32>
    %316 = tpu.concatenate %258, %277, %296, %315 in 1 : vector<8x8xf32>, vector<8x8xf32>, vector<8x8xf32>, vector<8x8xf32> -> vector<8x32xf32>
    %317 = vector.extract_strided_slice %220 {offsets = [8, 0], sizes = [8, 32], strides = [1, 1]} : vector<16x32xf32> to vector<8x32xf32>
    %318 = vector.extract_strided_slice %229 {offsets = [16, 0], sizes = [16, 32], strides = [1, 1]} : vector<32x32xf32> to vector<16x32xf32>
    %319 = vector.extract_strided_slice %236 {offsets = [16, 0], sizes = [16, 32], strides = [1, 1]} : vector<32x32xf32> to vector<16x32xf32>
    %320 = vector.extract_strided_slice %317 {offsets = [0, 0], sizes = [8, 8], strides = [1, 1]} : vector<8x32xf32> to vector<8x8xf32>
    %321 = vector.extract_strided_slice %318 {offsets = [0, 0], sizes = [16, 8], strides = [1, 1]} : vector<16x32xf32> to vector<16x8xf32>
    %322 = vector.extract_strided_slice %319 {offsets = [0, 0], sizes = [16, 8], strides = [1, 1]} : vector<16x32xf32> to vector<16x8xf32>
    %323 = arith.truncf %320 : vector<8x8xf32> to vector<8x8xbf16>
    %324 = arith.truncf %321 : vector<16x8xf32> to vector<16x8xbf16>
    %cst_93 = arith.constant dense<0.000000e+00> : vector<8x16xf32>
    %325 = tpu.matmul %323, %324, %cst_93 {dimension_numbers = #tpu.dot_dimension_numbers<[1], [1], [0], [0], [0, 0, 1, 0], [], []>} : vector<8x8xbf16>, vector<16x8xbf16>, vector<8x16xf32> -> vector<8x16xf32>
    %cst_94 = arith.constant dense<0xFF800000> : vector<8xf32>
    %326 = vector.multi_reduction <maximumf>, %325, %cst_94 [1] : vector<8x16xf32> to vector<8xf32>
    %327 = vector.shape_cast %326 : vector<8xf32> to vector<8x1xf32>
    %328 = vector.broadcast %327 : vector<8x1xf32> to vector<8x16xf32>
    %329 = arith.subf %325, %328 : vector<8x16xf32>
    %330 = math.exp %329 : vector<8x16xf32>
    %cst_95 = arith.constant dense<0.000000e+00> : vector<8xf32>
    %331 = vector.multi_reduction <add>, %330, %cst_95 [1] : vector<8x16xf32> to vector<8xf32>
    %332 = vector.shape_cast %331 : vector<8xf32> to vector<8x1xf32>
    %333 = tpu.reciprocal %332 {approx = true} : vector<8x1xf32> -> vector<8x1xf32>
    %334 = vector.broadcast %333 : vector<8x1xf32> to vector<8x16xf32>
    %335 = arith.mulf %330, %334 : vector<8x16xf32>
    %336 = arith.truncf %335 : vector<8x16xf32> to vector<8x16xbf16>
    %337 = arith.truncf %322 : vector<16x8xf32> to vector<16x8xbf16>
    %cst_96 = arith.constant dense<0.000000e+00> : vector<8x8xf32>
    %338 = tpu.matmul %336, %337, %cst_96 {dimension_numbers = #tpu.dot_dimension_numbers<[1], [0], [0], [1], [0, 0, 1, 1], [], []>} : vector<8x16xbf16>, vector<16x8xbf16>, vector<8x8xf32> -> vector<8x8xf32>
    %339 = vector.extract_strided_slice %317 {offsets = [0, 8], sizes = [8, 8], strides = [1, 1]} : vector<8x32xf32> to vector<8x8xf32>
    %340 = vector.extract_strided_slice %318 {offsets = [0, 8], sizes = [16, 8], strides = [1, 1]} : vector<16x32xf32> to vector<16x8xf32>
    %341 = vector.extract_strided_slice %319 {offsets = [0, 8], sizes = [16, 8], strides = [1, 1]} : vector<16x32xf32> to vector<16x8xf32>
    %342 = arith.truncf %339 : vector<8x8xf32> to vector<8x8xbf16>
    %343 = arith.truncf %340 : vector<16x8xf32> to vector<16x8xbf16>
    %cst_97 = arith.constant dense<0.000000e+00> : vector<8x16xf32>
    %344 = tpu.matmul %342, %343, %cst_97 {dimension_numbers = #tpu.dot_dimension_numbers<[1], [1], [0], [0], [0, 0, 1, 0], [], []>} : vector<8x8xbf16>, vector<16x8xbf16>, vector<8x16xf32> -> vector<8x16xf32>
    %cst_98 = arith.constant dense<0xFF800000> : vector<8xf32>
    %345 = vector.multi_reduction <maximumf>, %344, %cst_98 [1] : vector<8x16xf32> to vector<8xf32>
    %346 = vector.shape_cast %345 : vector<8xf32> to vector<8x1xf32>
    %347 = vector.broadcast %346 : vector<8x1xf32> to vector<8x16xf32>
    %348 = arith.subf %344, %347 : vector<8x16xf32>
    %349 = math.exp %348 : vector<8x16xf32>
    %cst_99 = arith.constant dense<0.000000e+00> : vector<8xf32>
    %350 = vector.multi_reduction <add>, %349, %cst_99 [1] : vector<8x16xf32> to vector<8xf32>
    %351 = vector.shape_cast %350 : vector<8xf32> to vector<8x1xf32>
    %352 = tpu.reciprocal %351 {approx = true} : vector<8x1xf32> -> vector<8x1xf32>
    %353 = vector.broadcast %352 : vector<8x1xf32> to vector<8x16xf32>
    %354 = arith.mulf %349, %353 : vector<8x16xf32>
    %355 = arith.truncf %354 : vector<8x16xf32> to vector<8x16xbf16>
    %356 = arith.truncf %341 : vector<16x8xf32> to vector<16x8xbf16>
    %cst_100 = arith.constant dense<0.000000e+00> : vector<8x8xf32>
    %357 = tpu.matmul %355, %356, %cst_100 {dimension_numbers = #tpu.dot_dimension_numbers<[1], [0], [0], [1], [0, 0, 1, 1], [], []>} : vector<8x16xbf16>, vector<16x8xbf16>, vector<8x8xf32> -> vector<8x8xf32>
    %358 = vector.extract_strided_slice %317 {offsets = [0, 16], sizes = [8, 8], strides = [1, 1]} : vector<8x32xf32> to vector<8x8xf32>
    %359 = vector.extract_strided_slice %318 {offsets = [0, 16], sizes = [16, 8], strides = [1, 1]} : vector<16x32xf32> to vector<16x8xf32>
    %360 = vector.extract_strided_slice %319 {offsets = [0, 16], sizes = [16, 8], strides = [1, 1]} : vector<16x32xf32> to vector<16x8xf32>
    %361 = arith.truncf %358 : vector<8x8xf32> to vector<8x8xbf16>
    %362 = arith.truncf %359 : vector<16x8xf32> to vector<16x8xbf16>
    %cst_101 = arith.constant dense<0.000000e+00> : vector<8x16xf32>
    %363 = tpu.matmul %361, %362, %cst_101 {dimension_numbers = #tpu.dot_dimension_numbers<[1], [1], [0], [0], [0, 0, 1, 0], [], []>} : vector<8x8xbf16>, vector<16x8xbf16>, vector<8x16xf32> -> vector<8x16xf32>
    %cst_102 = arith.constant dense<0xFF800000> : vector<8xf32>
    %364 = vector.multi_reduction <maximumf>, %363, %cst_102 [1] : vector<8x16xf32> to vector<8xf32>
    %365 = vector.shape_cast %364 : vector<8xf32> to vector<8x1xf32>
    %366 = vector.broadcast %365 : vector<8x1xf32> to vector<8x16xf32>
    %367 = arith.subf %363, %366 : vector<8x16xf32>
    %368 = math.exp %367 : vector<8x16xf32>
    %cst_103 = arith.constant dense<0.000000e+00> : vector<8xf32>
    %369 = vector.multi_reduction <add>, %368, %cst_103 [1] : vector<8x16xf32> to vector<8xf32>
    %370 = vector.shape_cast %369 : vector<8xf32> to vector<8x1xf32>
    %371 = tpu.reciprocal %370 {approx = true} : vector<8x1xf32> -> vector<8x1xf32>
    %372 = vector.broadcast %371 : vector<8x1xf32> to vector<8x16xf32>
    %373 = arith.mulf %368, %372 : vector<8x16xf32>
    %374 = arith.truncf %373 : vector<8x16xf32> to vector<8x16xbf16>
    %375 = arith.truncf %360 : vector<16x8xf32> to vector<16x8xbf16>
    %cst_104 = arith.constant dense<0.000000e+00> : vector<8x8xf32>
    %376 = tpu.matmul %374, %375, %cst_104 {dimension_numbers = #tpu.dot_dimension_numbers<[1], [0], [0], [1], [0, 0, 1, 1], [], []>} : vector<8x16xbf16>, vector<16x8xbf16>, vector<8x8xf32> -> vector<8x8xf32>
    %377 = vector.extract_strided_slice %317 {offsets = [0, 24], sizes = [8, 8], strides = [1, 1]} : vector<8x32xf32> to vector<8x8xf32>
    %378 = vector.extract_strided_slice %318 {offsets = [0, 24], sizes = [16, 8], strides = [1, 1]} : vector<16x32xf32> to vector<16x8xf32>
    %379 = vector.extract_strided_slice %319 {offsets = [0, 24], sizes = [16, 8], strides = [1, 1]} : vector<16x32xf32> to vector<16x8xf32>
    %380 = arith.truncf %377 : vector<8x8xf32> to vector<8x8xbf16>
    %381 = arith.truncf %378 : vector<16x8xf32> to vector<16x8xbf16>
    %cst_105 = arith.constant dense<0.000000e+00> : vector<8x16xf32>
    %382 = tpu.matmul %380, %381, %cst_105 {dimension_numbers = #tpu.dot_dimension_numbers<[1], [1], [0], [0], [0, 0, 1, 0], [], []>} : vector<8x8xbf16>, vector<16x8xbf16>, vector<8x16xf32> -> vector<8x16xf32>
    %cst_106 = arith.constant dense<0xFF800000> : vector<8xf32>
    %383 = vector.multi_reduction <maximumf>, %382, %cst_106 [1] : vector<8x16xf32> to vector<8xf32>
    %384 = vector.shape_cast %383 : vector<8xf32> to vector<8x1xf32>
    %385 = vector.broadcast %384 : vector<8x1xf32> to vector<8x16xf32>
    %386 = arith.subf %382, %385 : vector<8x16xf32>
    %387 = math.exp %386 : vector<8x16xf32>
    %cst_107 = arith.constant dense<0.000000e+00> : vector<8xf32>
    %388 = vector.multi_reduction <add>, %387, %cst_107 [1] : vector<8x16xf32> to vector<8xf32>
    %389 = vector.shape_cast %388 : vector<8xf32> to vector<8x1xf32>
    %390 = tpu.reciprocal %389 {approx = true} : vector<8x1xf32> -> vector<8x1xf32>
    %391 = vector.broadcast %390 : vector<8x1xf32> to vector<8x16xf32>
    %392 = arith.mulf %387, %391 : vector<8x16xf32>
    %393 = arith.truncf %392 : vector<8x16xf32> to vector<8x16xbf16>
    %394 = arith.truncf %379 : vector<16x8xf32> to vector<16x8xbf16>
    %cst_108 = arith.constant dense<0.000000e+00> : vector<8x8xf32>
    %395 = tpu.matmul %393, %394, %cst_108 {dimension_numbers = #tpu.dot_dimension_numbers<[1], [0], [0], [1], [0, 0, 1, 1], [], []>} : vector<8x16xbf16>, vector<16x8xbf16>, vector<8x8xf32> -> vector<8x8xf32>
    %396 = tpu.concatenate %338, %357, %376, %395 in 1 : vector<8x8xf32>, vector<8x8xf32>, vector<8x8xf32>, vector<8x8xf32> -> vector<8x32xf32>
    %397 = tpu.concatenate %316, %396 in 0 : vector<8x32xf32>, vector<8x32xf32> -> vector<16x32xf32>
    %c0_109 = arith.constant 0 : index
    %c0_110 = arith.constant 0 : index
    %398 = vector.load %arg17[%c0_109, %c0_110] : memref<32x32xf32, #tpu.memory_space<vmem>>, vector<32x32xf32>
    %399 = arith.truncf %397 : vector<16x32xf32> to vector<16x32xbf16>
    %400 = arith.truncf %398 : vector<32x32xf32> to vector<32x32xbf16>
    %cst_111 = arith.constant dense<0.000000e+00> : vector<16x32xf32>
    %401 = tpu.matmul %399, %400, %cst_111 {dimension_numbers = #tpu.dot_dimension_numbers<[1], [0], [0], [1], [0, 0, 1, 1], [], []>} : vector<16x32xbf16>, vector<32x32xbf16>, vector<16x32xf32> -> vector<16x32xf32>
    %c0_112 = arith.constant 0 : index
    %c0_113 = arith.constant 0 : index
    %402 = vector.load %arg18[%c0_112, %c0_113] : memref<1x32xf32, #tpu.memory_space<vmem>>, vector<1x32xf32>
    %403 = vector.broadcast %402 : vector<1x32xf32> to vector<16x32xf32>
    %404 = arith.addf %401, %403 : vector<16x32xf32>
    %405 = arith.addf %212, %404 : vector<16x32xf32>
    %c0_114 = arith.constant 0 : index
    %c0_115 = arith.constant 0 : index
    %406 = vector.load %arg25[%c0_114, %c0_115] : memref<1x32xf32, #tpu.memory_space<vmem>>, vector<1x32xf32>
    %c0_116 = arith.constant 0 : index
    %c0_117 = arith.constant 0 : index
    %407 = vector.load %arg26[%c0_116, %c0_117] : memref<1x32xf32, #tpu.memory_space<vmem>>, vector<1x32xf32>
    %cst_118 = arith.constant dense<0.000000e+00> : vector<16xf32>
    %408 = vector.multi_reduction <add>, %405, %cst_118 [1] : vector<16x32xf32> to vector<16xf32>
    %409 = vector.shape_cast %408 : vector<16xf32> to vector<16x1xf32>
    %cst_119 = arith.constant 3.200000e+01 : f32
    %410 = vector.broadcast %cst_119 : f32 to vector<16x1xf32>
    %411 = arith.divf %409, %410 : vector<16x1xf32>
    %412 = vector.broadcast %411 : vector<16x1xf32> to vector<16x32xf32>
    %413 = arith.subf %405, %412 : vector<16x32xf32>
    %414 = arith.mulf %413, %413 : vector<16x32xf32>
    %cst_120 = arith.constant dense<0.000000e+00> : vector<16xf32>
    %415 = vector.multi_reduction <add>, %414, %cst_120 [1] : vector<16x32xf32> to vector<16xf32>
    %416 = vector.shape_cast %415 : vector<16xf32> to vector<16x1xf32>
    %cst_121 = arith.constant 3.200000e+01 : f32
    %417 = vector.broadcast %cst_121 : f32 to vector<16x1xf32>
    %418 = arith.divf %416, %417 : vector<16x1xf32>
    %419 = vector.broadcast %411 : vector<16x1xf32> to vector<16x32xf32>
    %420 = arith.subf %405, %419 : vector<16x32xf32>
    %cst_122 = arith.constant 9.99999974E-6 : f32
    %421 = vector.broadcast %cst_122 : f32 to vector<16x1xf32>
    %422 = arith.addf %418, %421 : vector<16x1xf32>
    %423 = math.rsqrt %422 : vector<16x1xf32>
    %424 = vector.broadcast %423 : vector<16x1xf32> to vector<16x32xf32>
    %425 = arith.mulf %420, %424 : vector<16x32xf32>
    %426 = vector.broadcast %406 : vector<1x32xf32> to vector<16x32xf32>
    %427 = arith.mulf %425, %426 : vector<16x32xf32>
    %428 = vector.broadcast %407 : vector<1x32xf32> to vector<16x32xf32>
    %429 = arith.addf %427, %428 : vector<16x32xf32>
    %c0_123 = arith.constant 0 : index
    %c0_124 = arith.constant 0 : index
    %430 = vector.load %arg19[%c0_123, %c0_124] : memref<32x64xf32, #tpu.memory_space<vmem>>, vector<32x64xf32>
    %431 = arith.truncf %429 : vector<16x32xf32> to vector<16x32xbf16>
    %432 = arith.truncf %430 : vector<32x64xf32> to vector<32x64xbf16>
    %cst_125 = arith.constant dense<0.000000e+00> : vector<16x64xf32>
    %433 = tpu.matmul %431, %432, %cst_125 {dimension_numbers = #tpu.dot_dimension_numbers<[1], [0], [0], [1], [0, 0, 1, 1], [], []>} : vector<16x32xbf16>, vector<32x64xbf16>, vector<16x64xf32> -> vector<16x64xf32>
    %c0_126 = arith.constant 0 : index
    %c0_127 = arith.constant 0 : index
    %434 = vector.load %arg20[%c0_126, %c0_127] : memref<1x64xf32, #tpu.memory_space<vmem>>, vector<1x64xf32>
    %435 = vector.broadcast %434 : vector<1x64xf32> to vector<16x64xf32>
    %436 = arith.addf %433, %435 : vector<16x64xf32>
    %cst_128 = arith.constant 0.000000e+00 : f32
    %437 = vector.broadcast %cst_128 : f32 to vector<16x64xf32>
    %438 = arith.maximumf %436, %437 : vector<16x64xf32>
    %c0_129 = arith.constant 0 : index
    %c0_130 = arith.constant 0 : index
    %439 = vector.load %arg21[%c0_129, %c0_130] : memref<64x32xf32, #tpu.memory_space<vmem>>, vector<64x32xf32>
    %440 = arith.truncf %438 : vector<16x64xf32> to vector<16x64xbf16>
    %441 = arith.truncf %439 : vector<64x32xf32> to vector<64x32xbf16>
    %cst_131 = arith.constant dense<0.000000e+00> : vector<16x32xf32>
    %442 = tpu.matmul %440, %441, %cst_131 {dimension_numbers = #tpu.dot_dimension_numbers<[1], [0], [0], [1], [0, 0, 1, 1], [], []>} : vector<16x64xbf16>, vector<64x32xbf16>, vector<16x32xf32> -> vector<16x32xf32>
    %c0_132 = arith.constant 0 : index
    %c0_133 = arith.constant 0 : index
    %443 = vector.load %arg22[%c0_132, %c0_133] : memref<1x32xf32, #tpu.memory_space<vmem>>, vector<1x32xf32>
    %444 = vector.broadcast %443 : vector<1x32xf32> to vector<16x32xf32>
    %445 = arith.addf %442, %444 : vector<16x32xf32>
    %446 = arith.addf %429, %445 : vector<16x32xf32>
    %c0_134 = arith.constant 0 : index
    %c0_135 = arith.constant 0 : index
    %447 = vector.load %arg27[%c0_134, %c0_135] : memref<1x32xf32, #tpu.memory_space<vmem>>, vector<1x32xf32>
    %c0_136 = arith.constant 0 : index
    %c0_137 = arith.constant 0 : index
    %448 = vector.load %arg28[%c0_136, %c0_137] : memref<1x32xf32, #tpu.memory_space<vmem>>, vector<1x32xf32>
    %cst_138 = arith.constant dense<0.000000e+00> : vector<16xf32>
    %449 = vector.multi_reduction <add>, %446, %cst_138 [1] : vector<16x32xf32> to vector<16xf32>
    %450 = vector.shape_cast %449 : vector<16xf32> to vector<16x1xf32>
    %cst_139 = arith.constant 3.200000e+01 : f32
    %451 = vector.broadcast %cst_139 : f32 to vector<16x1xf32>
    %452 = arith.divf %450, %451 : vector<16x1xf32>
    %453 = vector.broadcast %452 : vector<16x1xf32> to vector<16x32xf32>
    %454 = arith.subf %446, %453 : vector<16x32xf32>
    %455 = arith.mulf %454, %454 : vector<16x32xf32>
    %cst_140 = arith.constant dense<0.000000e+00> : vector<16xf32>
    %456 = vector.multi_reduction <add>, %455, %cst_140 [1] : vector<16x32xf32> to vector<16xf32>
    %457 = vector.shape_cast %456 : vector<16xf32> to vector<16x1xf32>
    %cst_141 = arith.constant 3.200000e+01 : f32
    %458 = vector.broadcast %cst_141 : f32 to vector<16x1xf32>
    %459 = arith.divf %457, %458 : vector<16x1xf32>
    %460 = vector.broadcast %452 : vector<16x1xf32> to vector<16x32xf32>
    %461 = arith.subf %446, %460 : vector<16x32xf32>
    %cst_142 = arith.constant 9.99999974E-6 : f32
    %462 = vector.broadcast %cst_142 : f32 to vector<16x1xf32>
    %463 = arith.addf %459, %462 : vector<16x1xf32>
    %464 = math.rsqrt %463 : vector<16x1xf32>
    %465 = vector.broadcast %464 : vector<16x1xf32> to vector<16x32xf32>
    %466 = arith.mulf %461, %465 : vector<16x32xf32>
    %467 = vector.broadcast %447 : vector<1x32xf32> to vector<16x32xf32>
    %468 = arith.mulf %466, %467 : vector<16x32xf32>
    %469 = vector.broadcast %448 : vector<1x32xf32> to vector<16x32xf32>
    %470 = arith.addf %468, %469 : vector<16x32xf32>
    %c0_143 = arith.constant 0 : index
    %c0_144 = arith.constant 0 : index
    %471 = vector.load %arg29[%c0_143, %c0_144] : memref<16x32xf32, #tpu.memory_space<vmem>>, vector<16x32xf32>
    tpu.vector_store %arg29[%c0_143, %c0_144], %470 {strides = array<i32>} : memref<16x32xf32, #tpu.memory_space<vmem>>, vector<16x32xf32>,
    return
  }
  func.func @transform_0(%arg0: i32) -> (i32, i32) {
    %c0_i32 = arith.constant 0 : i32
    %c0_i32_0 = arith.constant 0 : i32
    %c0_i32_1 = arith.constant 0 : i32
    return %c0_i32, %c0_i32_0 : i32, i32
  }
  func.func @transform_1(%arg0: i32) -> (i32, i32) {
    %c0_i32 = arith.constant 0 : i32
    %c0_i32_0 = arith.constant 0 : i32
    %c0_i32_1 = arith.constant 0 : i32
    return %c0_i32, %c0_i32_0 : i32, i32
  }
  func.func @transform_2(%arg0: i32) -> (i32, i32) {
    %c0_i32 = arith.constant 0 : i32
    %c0_i32_0 = arith.constant 0 : i32
    %c0_i32_1 = arith.constant 0 : i32
    return %c0_i32, %c0_i32_0 : i32, i32
  }
  func.func @transform_3(%arg0: i32) -> (i32, i32) {
    %c0_i32 = arith.constant 0 : i32
    %c0_i32_0 = arith.constant 0 : i32
    %c0_i32_1 = arith.constant 0 : i32
    return %c0_i32, %c0_i32_0 : i32, i32
  }
  func.func @transform_4(%arg0: i32) -> (i32, i32) {
    %c0_i32 = arith.constant 0 : i32
    %c0_i32_0 = arith.constant 0 : i32
    %c0_i32_1 = arith.constant 0 : i32
    return %c0_i32, %c0_i32_0 : i32, i32
  }
  func.func @transform_5(%arg0: i32) -> (i32, i32) {
    %c0_i32 = arith.constant 0 : i32
    %c0_i32_0 = arith.constant 0 : i32
    %c0_i32_1 = arith.constant 0 : i32
    return %c0_i32, %c0_i32_0 : i32, i32
  }
  func.func @transform_6(%arg0: i32) -> (i32, i32) {
    %c0_i32 = arith.constant 0 : i32
    %c0_i32_0 = arith.constant 0 : i32
    %c0_i32_1 = arith.constant 0 : i32
    return %c0_i32, %c0_i32_0 : i32, i32
  }
  func.func @transform_7(%arg0: i32) -> (i32, i32) {
    %c0_i32 = arith.constant 0 : i32
    %c0_i32_0 = arith.constant 0 : i32
    %c0_i32_1 = arith.constant 0 : i32
    return %c0_i32, %c0_i32_0 : i32, i32
  }
  func.func @transform_8(%arg0: i32) -> (i32, i32) {
    %c0_i32 = arith.constant 0 : i32
    %c0_i32_0 = arith.constant 0 : i32
    %c0_i32_1 = arith.constant 0 : i32
    return %c0_i32, %c0_i32_0 : i32, i32
  }
  func.func @transform_9(%arg0: i32) -> (i32, i32) {
    %c0_i32 = arith.constant 0 : i32
    %c0_i32_0 = arith.constant 0 : i32
    %c0_i32_1 = arith.constant 0 : i32
    return %c0_i32, %c0_i32_0 : i32, i32
  }
  func.func @transform_10(%arg0: i32) -> (i32, i32) {
    %c0_i32 = arith.constant 0 : i32
    %c0_i32_0 = arith.constant 0 : i32
    %c0_i32_1 = arith.constant 0 : i32
    return %c0_i32, %c0_i32_0 : i32, i32
  }
  func.func @transform_11(%arg0: i32) -> (i32, i32) {
    %c0_i32 = arith.constant 0 : i32
    %c0_i32_0 = arith.constant 0 : i32
    %c0_i32_1 = arith.constant 0 : i32
    return %c0_i32, %c0_i32_0 : i32, i32
  }
  func.func @transform_12(%arg0: i32) -> (i32, i32) {
    %c0_i32 = arith.constant 0 : i32
    %c0_i32_0 = arith.constant 0 : i32
    %c0_i32_1 = arith.constant 0 : i32
    return %c0_i32, %c0_i32_0 : i32, i32
  }
  func.func @transform_13(%arg0: i32) -> (i32, i32) {
    %c0_i32 = arith.constant 0 : i32
    %c0_i32_0 = arith.constant 0 : i32
    %c0_i32_1 = arith.constant 0 : i32
    return %c0_i32, %c0_i32_0 : i32, i32
  }
  func.func @transform_14(%arg0: i32) -> (i32, i32) {
    %c0_i32 = arith.constant 0 : i32
    %c0_i32_0 = arith.constant 0 : i32
    %c0_i32_1 = arith.constant 0 : i32
    return %c0_i32, %c0_i32_0 : i32, i32
  }
  func.func @transform_15(%arg0: i32) -> (i32, i32) {
    %c0_i32 = arith.constant 0 : i32
    %c0_i32_0 = arith.constant 0 : i32
    %c0_i32_1 = arith.constant 0 : i32
    return %c0_i32, %c0_i32_0 : i32, i32
  }
  func.func @transform_16(%arg0: i32) -> (i32, i32) {
    %c0_i32 = arith.constant 0 : i32
    %c0_i32_0 = arith.constant 0 : i32
    %c0_i32_1 = arith.constant 0 : i32
    return %c0_i32, %c0_i32_0 : i32, i32
  }
  func.func @transform_17(%arg0: i32) -> (i32, i32) {
    %c0_i32 = arith.constant 0 : i32
    %c0_i32_0 = arith.constant 0 : i32
    %c0_i32_1 = arith.constant 0 : i32
    return %c0_i32, %c0_i32_0 : i32, i32
  }
  func.func @transform_18(%arg0: i32) -> (i32, i32) {
    %c0_i32 = arith.constant 0 : i32
    %c0_i32_0 = arith.constant 0 : i32
    %c0_i32_1 = arith.constant 0 : i32
    return %c0_i32, %c0_i32_0 : i32, i32
  }
  func.func @transform_19(%arg0: i32) -> (i32, i32) {
    %c0_i32 = arith.constant 0 : i32
    %c0_i32_0 = arith.constant 0 : i32
    %c0_i32_1 = arith.constant 0 : i32
    return %c0_i32, %c0_i32_0 : i32, i32
  }
  func.func @transform_20(%arg0: i32) -> (i32, i32) {
    %c0_i32 = arith.constant 0 : i32
    %c0_i32_0 = arith.constant 0 : i32
    %c0_i32_1 = arith.constant 0 : i32
    return %c0_i32, %c0_i32_0 : i32, i32
  }
  func.func @transform_21(%arg0: i32) -> (i32, i32) {
    %c0_i32 = arith.constant 0 : i32
    %c0_i32_0 = arith.constant 0 : i32
    %c0_i32_1 = arith.constant 0 : i32
    return %c0_i32, %c0_i32_0 : i32, i32
  }
  func.func @transform_22(%arg0: i32) -> (i32, i32) {
    %c0_i32 = arith.constant 0 : i32
    %c0_i32_0 = arith.constant 0 : i32
    %c0_i32_1 = arith.constant 0 : i32
    return %c0_i32, %c0_i32_0 : i32, i32
  }
  func.func @transform_23(%arg0: i32) -> (i32, i32) {
    %c0_i32 = arith.constant 0 : i32
    %c0_i32_0 = arith.constant 0 : i32
    %c0_i32_1 = arith.constant 0 : i32
    return %c0_i32, %c0_i32_0 : i32, i32
  }
  func.func @transform_24(%arg0: i32) -> (i32, i32) {
    %c0_i32 = arith.constant 0 : i32
    %c0_i32_0 = arith.constant 0 : i32
    %c0_i32_1 = arith.constant 0 : i32
    return %c0_i32, %c0_i32_0 : i32, i32
  }
  func.func @transform_25(%arg0: i32) -> (i32, i32) {
    %c0_i32 = arith.constant 0 : i32
    %c0_i32_0 = arith.constant 0 : i32
    %c0_i32_1 = arith.constant 0 : i32
    return %c0_i32, %c0_i32_0 : i32, i32
  }
  func.func @transform_26(%arg0: i32) -> (i32, i32) {
    %c0_i32 = arith.constant 0 : i32
    %c0_i32_0 = arith.constant 0 : i32
    %c0_i32_1 = arith.constant 0 : i32
    return %c0_i32, %c0_i32_0 : i32, i32
  }
  func.func @transform_27(%arg0: i32) -> (i32, i32) {
    %c0_i32 = arith.constant 0 : i32
    %c0_i32_0 = arith.constant 0 : i32
    %c0_i32_1 = arith.constant 0 : i32
    return %c0_i32, %c0_i32_0 : i32, i32
  }
  func.func @transform_28(%arg0: i32) -> (i32, i32) {
    %c0_i32 = arith.constant 0 : i32
    %c0_i32_0 = arith.constant 0 : i32
    %c0_i32_1 = arith.constant 0 : i32
    return %c0_i32, %c0_i32_0 : i32, i32
  }
}

</mosaic_0001>

<llo_original>
// kernel: tpu_custom_call.1
$region0: #{tpu_custom_call.1}
  #allocation0 [shape = 'u32[]', space=smem, size = 0x4, offset = 0x4, fixed_abs, tag = 'smem constant byte address 0x4 - core index']
  #allocation1 [shape = 'u32[72,128]{1,0:T(1,128)}', space=vmem, size = 0x9000, scoped, tag = 'internal scratch']
  %s0 = inlined_call_operand.hbm [shape: f32[16,32], index: 0, kind: input, shape index: {}]
  %s1 = inlined_call_operand.vmem [shape: f32[32,32], index: 1, kind: input, shape index: {}]
  %s2 = inlined_call_operand.vmem [shape: f32[32,32], index: 2, kind: input, shape index: {}]
  %s3 = inlined_call_operand.hbm [shape: f32[16,32], index: 3, kind: input, shape index: {}]
  %s4 = inlined_call_operand.vmem [shape: f32[32,64], index: 4, kind: input, shape index: {}]
  %s5 = inlined_call_operand.vmem [shape: f32[1,64], index: 5, kind: input, shape index: {}]
  %s6 = inlined_call_operand.hbm [shape: f32[32,32], index: 6, kind: input, shape index: {}]
  %s7 = inlined_call_operand.vmem [shape: f32[1,32], index: 7, kind: input, shape index: {}]
  %s8 = inlined_call_operand.hbm [shape: f32[32,32], index: 8, kind: input, shape index: {}]
  %s9 = inlined_call_operand.vmem [shape: f32[1,32], index: 9, kind: input, shape index: {}]
  %s10 = inlined_call_operand.hbm [shape: f32[32,32], index: 10, kind: input, shape index: {}]
  %s11 = inlined_call_operand.vmem [shape: f32[1,32], index: 11, kind: input, shape index: {}]
  %s12 = inlined_call_operand.hbm [shape: f32[32,32], index: 12, kind: input, shape index: {}]
  %s13 = inlined_call_operand.vmem [shape: f32[1,32], index: 13, kind: input, shape index: {}]
  %s14 = inlined_call_operand.hbm [shape: f32[32,32], index: 14, kind: input, shape index: {}]
  %s15 = inlined_call_operand.vmem [shape: f32[1,32], index: 15, kind: input, shape index: {}]
  %s16 = inlined_call_operand.hbm [shape: f32[32,32], index: 16, kind: input, shape index: {}]
  %s17 = inlined_call_operand.vmem [shape: f32[1,32], index: 17, kind: input, shape index: {}]
  %s18 = inlined_call_operand.hbm [shape: f32[32,64], index: 18, kind: input, shape index: {}]
  %s19 = inlined_call_operand.vmem [shape: f32[1,64], index: 19, kind: input, shape index: {}]
  %s20 = inlined_call_operand.vmem [shape: f32[64,32], index: 20, kind: input, shape index: {}]
  %s21 = inlined_call_operand.vmem [shape: f32[1,32], index: 21, kind: input, shape index: {}]
  %s22 = inlined_call_operand.vmem [shape: f32[1,32], index: 22, kind: input, shape index: {}]
  %s23 = inlined_call_operand.vmem [shape: f32[1,32], index: 23, kind: input, shape index: {}]
  %s24 = inlined_call_operand.vmem [shape: f32[1,32], index: 24, kind: input, shape index: {}]
  %s25 = inlined_call_operand.vmem [shape: f32[1,32], index: 25, kind: input, shape index: {}]
  %s26 = inlined_call_operand.vmem [shape: f32[1,32], index: 26, kind: input, shape index: {}]
  %s27 = inlined_call_operand.vmem [shape: f32[1,32], index: 27, kind: input, shape index: {}]
  %s28 = inlined_call_operand.hbm [shape: f32[16,32], index: 28, kind: output, shape index: {}]
  %s29 = sld [smem:[#allocation0]]
  $region158: #{tpu_custom_call.1} parent=0
    _
  %s31 = ssub.s32 1, %s29
  %s32 = scalar_select 0, %s31, %s29
  $region1: #{tpu_custom_call.1} parent=0
    #allocation2 [shape = 'u8[8192]{0}', space=vmem, size = 0x2000, scoped, tag = 'input window, operand 0, single buffered']
    #allocation3 [shape = 's32[1]{0}', space=sflag, size = 0x4, scoped, tag = 'scoped memory for tpu_custom_call.1']
    #allocation4 [shape = 's32[1]{0}', space=sflag, size = 0x4, scoped, tag = 'scoped memory for tpu_custom_call.1']
    #allocation5 [shape = 'u8[8192]{0}', space=vmem, size = 0x2000, scoped, tag = 'input window, operand 3, single buffered']
    #allocation6 [shape = 's32[1]{0}', space=sflag, size = 0x4, scoped, tag = 'scoped memory for tpu_custom_call.1']
    #allocation7 [shape = 'u8[16384]{0}', space=vmem, size = 0x4000, scoped, tag = 'input window, operand 6, single buffered']
    #allocation8 [shape = 'u8[16384]{0}', space=vmem, size = 0x4000, scoped, tag = 'input window, operand 8, single buffered']
    #allocation9 [shape = 's32[1]{0}', space=sflag, size = 0x4, scoped, tag = 'scoped memory for tpu_custom_call.1']
    #allocation10 [shape = 'u8[16384]{0}', space=vmem, size = 0x4000, scoped, tag = 'input window, operand 10, single buffered']
    #allocation11 [shape = 'u8[16384]{0}', space=vmem, size = 0x4000, scoped, tag = 'input window, operand 12, single buffered']
    #allocation12 [shape = 's32[1]{0}', space=sflag, size = 0x4, scoped, tag = 'scoped memory for tpu_custom_call.1']
    #allocation13 [shape = 'u8[16384]{0}', space=vmem, size = 0x4000, scoped, tag = 'input window, operand 14, single buffered']
    #allocation14 [shape = 'u8[16384]{0}', space=vmem, size = 0x4000, scoped, tag = 'input window, operand 16, single buffered']
    #allocation15 [shape = 's32[1]{0}', space=sflag, size = 0x4, scoped, tag = 'scoped memory for tpu_custom_call.1']
    #allocation16 [shape = 'u8[16384]{0}', space=vmem, size = 0x4000, scoped, tag = 'input window, operand 18, single buffered']
    #allocation17 [shape = 'u8[8192]{0}', space=vmem, size = 0x2000, scoped, tag = 'output window, operand 0, single buffered']
    %33 = vsyncpa [#allocation3], 0
    %34 = vsyncpa [#allocation6], 0
    %35 = vsyncpa [#allocation9], 0
    %36 = vsyncpa [#allocation12], 0
    %37 = vsyncpa [#allocation15], 0
    %38 = vsyncpa [#allocation4], 0
    // Predicated region
    $region2: #{tpu_custom_call.1} parent=1 // pred_check
      _
    $region3: #{tpu_custom_call.1} parent=1 // pred_check_branch
      %40 = sbr.rel (0) target = $region5
    $region4: #{tpu_custom_call.1} parent=1 // pred_region
      %42 = vsyncadd [#allocation3], 0
      %s43 = sshll.u32 %s0, 4
      %s44 = int_to_ptr.hbm [resolvable:$true] %s43
      %s45 = sshll.u32 [#allocation2], 4
      %s46 = int_to_ptr.vmem [resolvable:$true] %s45
      %51 = dma.hbm_to_vmem [thread:$0]  %s44, 256, %s46, [#allocation3], 128, 128, 8
    $region5: #{tpu_custom_call.1} parent=1 // pred_fallthru
      _
    // Predicated region
    $region6: #{tpu_custom_call.1} parent=1 // pred_check
      _
    $region7: #{tpu_custom_call.1} parent=1 // pred_check_branch
      %53 = sbr.rel (0) target = $region9
    $region8: #{tpu_custom_call.1} parent=1 // pred_region
      _
    $region9: #{tpu_custom_call.1} parent=1 // pred_fallthru
      _
    // Predicated region
    $region10: #{tpu_custom_call.1} parent=1 // pred_check
      _
    $region11: #{tpu_custom_call.1} parent=1 // pred_check_branch
      %55 = sbr.rel (0) target = $region13
    $region12: #{tpu_custom_call.1} parent=1 // pred_region
      _
    $region13: #{tpu_custom_call.1} parent=1 // pred_fallthru
      _
    // Predicated region
    $region14: #{tpu_custom_call.1} parent=1 // pred_check
      _
    $region15: #{tpu_custom_call.1} parent=1 // pred_check_branch
      %57 = sbr.rel (0) target = $region17
    $region16: #{tpu_custom_call.1} parent=1 // pred_region
      %59 = vsyncadd [#allocation6], 0
      %s60 = sshll.u32 %s3, 4
      %s61 = int_to_ptr.hbm [resolvable:$true] %s60
      %s62 = sshll.u32 [#allocation5], 4
      %s63 = int_to_ptr.vmem [resolvable:$true] %s62
      %68 = dma.hbm_to_vmem [thread:$0]  %s61, 256, %s63, [#allocation6], 128, 128, 8
    $region17: #{tpu_custom_call.1} parent=1 // pred_fallthru
      _
    // Predicated region
    $region18: #{tpu_custom_call.1} parent=1 // pred_check
      _
    $region19: #{tpu_custom_call.1} parent=1 // pred_check_branch
      %70 = sbr.rel (0) target = $region21
    $region20: #{tpu_custom_call.1} parent=1 // pred_region
      _
    $region21: #{tpu_custom_call.1} parent=1 // pred_fallthru
      _
    // Predicated region
    $region22: #{tpu_custom_call.1} parent=1 // pred_check
      _
    $region23: #{tpu_custom_call.1} parent=1 // pred_check_branch
      %72 = sbr.rel (0) target = $region25
    $region24: #{tpu_custom_call.1} parent=1 // pred_region
      _
    $region25: #{tpu_custom_call.1} parent=1 // pred_fallthru
      _
    // Predicated region
    $region26: #{tpu_custom_call.1} parent=1 // pred_check
      _
    $region27: #{tpu_custom_call.1} parent=1 // pred_check_branch
      %74 = sbr.rel (0) target = $region29
    $region28: #{tpu_custom_call.1} parent=1 // pred_region
      %76 = vsyncadd [#allocation6], 0
      %s77 = sshll.u32 %s6, 4
      %s78 = int_to_ptr.hbm [resolvable:$true] %s77
      %s79 = sshll.u32 [#allocation7], 4
      %s80 = int_to_ptr.vmem [resolvable:$true] %s79
      %85 = dma.hbm_to_vmem [thread:$0]  %s78, 512, %s80, [#allocation6], 128, 128, 8
    $region29: #{tpu_custom_call.1} parent=1 // pred_fallthru
      _
    // Predicated region
    $region30: #{tpu_custom_call.1} parent=1 // pred_check
      _
    $region31: #{tpu_custom_call.1} parent=1 // pred_check_branch
      %87 = sbr.rel (0) target = $region33
    $region32: #{tpu_custom_call.1} parent=1 // pred_region
      _
    $region33: #{tpu_custom_call.1} parent=1 // pred_fallthru
      _
    // Predicated region
    $region34: #{tpu_custom_call.1} parent=1 // pred_check
      _
    $region35: #{tpu_custom_call.1} parent=1 // pred_check_branch
      %89 = sbr.rel (0) target = $region37
    $region36: #{tpu_custom_call.1} parent=1 // pred_region
      %91 = vsyncadd [#allocation9], 0
      %s92 = sshll.u32 %s8, 4
      %s93 = int_to_ptr.hbm [resolvable:$true] %s92
      %s94 = sshll.u32 [#allocation8], 4
      %s95 = int_to_ptr.vmem [resolvable:$true] %s94
      %100 = dma.hbm_to_vmem [thread:$0]  %s93, 512, %s95, [#allocation9], 128, 128, 8
    $region37: #{tpu_custom_call.1} parent=1 // pred_fallthru
      _
    // Predicated region
    $region38: #{tpu_custom_call.1} parent=1 // pred_check
      _
    $region39: #{tpu_custom_call.1} parent=1 // pred_check_branch
      %102 = sbr.rel (0) target = $region41
    $region40: #{tpu_custom_call.1} parent=1 // pred_region
      _
    $region41: #{tpu_custom_call.1} parent=1 // pred_fallthru
      _
    // Predicated region
    $region42: #{tpu_custom_call.1} parent=1 // pred_check
      _
    $region43: #{tpu_custom_call.1} parent=1 // pred_check_branch
      %104 = sbr.rel (0) target = $region45
    $region44: #{tpu_custom_call.1} parent=1 // pred_region
      %106 = vsyncadd [#allocation9], 0
      %s107 = sshll.u32 %s10, 4
      %s108 = int_to_ptr.hbm [resolvable:$true] %s107
      %s109 = sshll.u32 [#allocation10], 4
      %s110 = int_to_ptr.vmem [resolvable:$true] %s109
      %115 = dma.hbm_to_vmem [thread:$0]  %s108, 512, %s110, [#allocation9], 128, 128, 8
    $region45: #{tpu_custom_call.1} parent=1 // pred_fallthru
      _
    // Predicated region
    $region46: #{tpu_custom_call.1} parent=1 // pred_check
      _
    $region47: #{tpu_custom_call.1} parent=1 // pred_check_branch
      %117 = sbr.rel (0) target = $region49
    $region48: #{tpu_custom_call.1} parent=1 // pred_region
      _
    $region49: #{tpu_custom_call.1} parent=1 // pred_fallthru
      _
    // Predicated region
    $region50: #{tpu_custom_call.1} parent=1 // pred_check
      _
    $region51: #{tpu_custom_call.1} parent=1 // pred_check_branch
      %119 = sbr.rel (0) target = $region53
    $region52: #{tpu_custom_call.1} parent=1 // pred_region
      %121 = vsyncadd [#allocation12], 0
      %s122 = sshll.u32 %s12, 4
      %s123 = int_to_ptr.hbm [resolvable:$true] %s122
      %s124 = sshll.u32 [#allocation11], 4
      %s125 = int_to_ptr.vmem [resolvable:$true] %s124
      %130 = dma.hbm_to_vmem [thread:$0]  %s123, 512, %s125, [#allocation12], 128, 128, 8
    $region53: #{tpu_custom_call.1} parent=1 // pred_fallthru
      _
    // Predicated region
    $region54: #{tpu_custom_call.1} parent=1 // pred_check
      _
    $region55: #{tpu_custom_call.1} parent=1 // pred_check_branch
      %132 = sbr.rel (0) target = $region57
    $region56: #{tpu_custom_call.1} parent=1 // pred_region
      _
    $region57: #{tpu_custom_call.1} parent=1 // pred_fallthru
      _
    // Predicated region
    $region58: #{tpu_custom_call.1} parent=1 // pred_check
      _
    $region59: #{tpu_custom_call.1} parent=1 // pred_check_branch
      %134 = sbr.rel (0) target = $region61
    $region60: #{tpu_custom_call.1} parent=1 // pred_region
      %136 = vsyncadd [#allocation12], 0
      %s137 = sshll.u32 %s14, 4
      %s138 = int_to_ptr.hbm [resolvable:$true] %s137
      %s139 = sshll.u32 [#allocation13], 4
      %s140 = int_to_ptr.vmem [resolvable:$true] %s139
      %145 = dma.hbm_to_vmem [thread:$0]  %s138, 512, %s140, [#allocation12], 128, 128, 8
    $region61: #{tpu_custom_call.1} parent=1 // pred_fallthru
      _
    // Predicated region
    $region62: #{tpu_custom_call.1} parent=1 // pred_check
      _
    $region63: #{tpu_custom_call.1} parent=1 // pred_check_branch
      %147 = sbr.rel (0) target = $region65
    $region64: #{tpu_custom_call.1} parent=1 // pred_region
      _
    $region65: #{tpu_custom_call.1} parent=1 // pred_fallthru
      _
    // Predicated region
    $region66: #{tpu_custom_call.1} parent=1 // pred_check
      _
    $region67: #{tpu_custom_call.1} parent=1 // pred_check_branch
      %149 = sbr.rel (0) target = $region69
    $region68: #{tpu_custom_call.1} parent=1 // pred_region
      %151 = vsyncadd [#allocation15], 0
      %s152 = sshll.u32 %s16, 4
      %s153 = int_to_ptr.hbm [resolvable:$true] %s152
      %s154 = sshll.u32 [#allocation14], 4
      %s155 = int_to_ptr.vmem [resolvable:$true] %s154
      %160 = dma.hbm_to_vmem [thread:$0]  %s153, 512, %s155, [#allocation15], 128, 128, 8
    $region69: #{tpu_custom_call.1} parent=1 // pred_fallthru
      _
    // Predicated region
    $region70: #{tpu_custom_call.1} parent=1 // pred_check
      _
    $region71: #{tpu_custom_call.1} parent=1 // pred_check_branch
      %162 = sbr.rel (0) target = $region73
    $region72: #{tpu_custom_call.1} parent=1 // pred_region
      _
    $region73: #{tpu_custom_call.1} parent=1 // pred_fallthru
      _
    // Predicated region
    $region74: #{tpu_custom_call.1} parent=1 // pred_check
      _
    $region75: #{tpu_custom_call.1} parent=1 // pred_check_branch
      %164 = sbr.rel (0) target = $region77
    $region76: #{tpu_custom_call.1} parent=1 // pred_region
      %166 = vsyncadd [#allocation15], 0
      %s167 = sshll.u32 %s18, 4
      %s168 = int_to_ptr.hbm [resolvable:$true] %s167
      %s169 = sshll.u32 [#allocation16], 4
      %s170 = int_to_ptr.vmem [resolvable:$true] %s169
      %175 = dma.hbm_to_vmem [thread:$0]  %s168, 512, %s170, [#allocation15], 128, 128, 8
    $region77: #{tpu_custom_call.1} parent=1 // pred_fallthru
      _
    // Predicated region
    $region78: #{tpu_custom_call.1} parent=1 // pred_check
      _
    $region79: #{tpu_custom_call.1} parent=1 // pred_check_branch
      %177 = sbr.rel (0) target = $region81
    $region80: #{tpu_custom_call.1} parent=1 // pred_region
      _
    $region81: #{tpu_custom_call.1} parent=1 // pred_fallthru
      _
    // Predicated region
    $region82: #{tpu_custom_call.1} parent=1 // pred_check
      _
    $region83: #{tpu_custom_call.1} parent=1 // pred_check_branch
      %179 = sbr.rel (0) target = $region85
    $region84: #{tpu_custom_call.1} parent=1 // pred_region
      _
    $region85: #{tpu_custom_call.1} parent=1 // pred_fallthru
      _
    // Predicated region
    $region86: #{tpu_custom_call.1} parent=1 // pred_check
      _
    $region87: #{tpu_custom_call.1} parent=1 // pred_check_branch
      %181 = sbr.rel (0) target = $region89
    $region88: #{tpu_custom_call.1} parent=1 // pred_region
      _
    $region89: #{tpu_custom_call.1} parent=1 // pred_fallthru
      _
    // Predicated region
    $region90: #{tpu_custom_call.1} parent=1 // pred_check
      _
    $region91: #{tpu_custom_call.1} parent=1 // pred_check_branch
      %183 = sbr.rel (0) target = $region93
    $region92: #{tpu_custom_call.1} parent=1 // pred_region
      _
    $region93: #{tpu_custom_call.1} parent=1 // pred_fallthru
      _
    // Predicated region
    $region94: #{tpu_custom_call.1} parent=1 // pred_check
      _
    $region95: #{tpu_custom_call.1} parent=1 // pred_check_branch
      %185 = sbr.rel (0) target = $region97
    $region96: #{tpu_custom_call.1} parent=1 // pred_region
      _
    $region97: #{tpu_custom_call.1} parent=1 // pred_fallthru
      _
    // Predicated region
    $region98: #{tpu_custom_call.1} parent=1 // pred_check
      _
    $region99: #{tpu_custom_call.1} parent=1 // pred_check_branch
      %187 = sbr.rel (0) target = $region101
    $region100: #{tpu_custom_call.1} parent=1 // pred_region
      _
    $region101: #{tpu_custom_call.1} parent=1 // pred_fallthru
      _
    // Predicated region
    $region102: #{tpu_custom_call.1} parent=1 // pred_check
      _
    $region103: #{tpu_custom_call.1} parent=1 // pred_check_branch
      %189 = sbr.rel (0) target = $region105
    $region104: #{tpu_custom_call.1} parent=1 // pred_region
      _
    $region105: #{tpu_custom_call.1} parent=1 // pred_fallthru
      _
    // Predicated region
    $region106: #{tpu_custom_call.1} parent=1 // pred_check
      _
    $region107: #{tpu_custom_call.1} parent=1 // pred_check_branch
      %191 = sbr.rel (0) target = $region109
    $region108: #{tpu_custom_call.1} parent=1 // pred_region
      _
    $region109: #{tpu_custom_call.1} parent=1 // pred_fallthru
      _
    // Predicated region
    $region110: #{tpu_custom_call.1} parent=1 // pred_check
      _
    $region111: #{tpu_custom_call.1} parent=1 // pred_check_branch
      %193 = sbr.rel (0) target = $region113
    $region112: #{tpu_custom_call.1} parent=1 // pred_region
      _
    $region113: #{tpu_custom_call.1} parent=1 // pred_fallthru
      _
    // Predicated region
    $region114: #{tpu_custom_call.1} parent=1 // pred_check
      _
    $region115: #{tpu_custom_call.1} parent=1 // pred_check_branch
      %195 = sbr.rel (0) target = $region117
    $region116: #{tpu_custom_call.1} parent=1 // pred_region
      %197 = dma.done [#allocation3], 256
    $region117: #{tpu_custom_call.1} parent=1 // pred_fallthru
      _
    // Predicated region
    $region118: #{tpu_custom_call.1} parent=1 // pred_check
      _
    $region119: #{tpu_custom_call.1} parent=1 // pred_check_branch
      %199 = sbr.rel (0) target = $region121
    $region120: #{tpu_custom_call.1} parent=1 // pred_region
      %201 = dma.done [#allocation6], 256
    $region121: #{tpu_custom_call.1} parent=1 // pred_fallthru
      _
    // Predicated region
    $region122: #{tpu_custom_call.1} parent=1 // pred_check
      _
    $region123: #{tpu_custom_call.1} parent=1 // pred_check_branch
      %203 = sbr.rel (0) target = $region125
    $region124: #{tpu_custom_call.1} parent=1 // pred_region
      %205 = dma.done [#allocation6], 512
    $region125: #{tpu_custom_call.1} parent=1 // pred_fallthru
      _
    // Predicated region
    $region126: #{tpu_custom_call.1} parent=1 // pred_check
      _
    $region127: #{tpu_custom_call.1} parent=1 // pred_check_branch
      %207 = sbr.rel (0) target = $region129
    $region128: #{tpu_custom_call.1} parent=1 // pred_region
      %209 = dma.done [#allocation9], 512
    $region129: #{tpu_custom_call.1} parent=1 // pred_fallthru
      _
    // Predicated region
    $region130: #{tpu_custom_call.1} parent=1 // pred_check
      _
    $region131: #{tpu_custom_call.1} parent=1 // pred_check_branch
      %211 = sbr.rel (0) target = $region133
    $region132: #{tpu_custom_call.1} parent=1 // pred_region
      %213 = dma.done [#allocation9], 512
    $region133: #{tpu_custom_call.1} parent=1 // pred_fallthru
      _
    // Predicated region
    $region134: #{tpu_custom_call.1} parent=1 // pred_check
      _
    $region135: #{tpu_custom_call.1} parent=1 // pred_check_branch
      %215 = sbr.rel (0) target = $region137
    $region136: #{tpu_custom_call.1} parent=1 // pred_region
      %217 = dma.done [#allocation12], 512
    $region137: #{tpu_custom_call.1} parent=1 // pred_fallthru
      _
    // Predicated region
    $region138: #{tpu_custom_call.1} parent=1 // pred_check
      _
    $region139: #{tpu_custom_call.1} parent=1 // pred_check_branch
      %219 = sbr.rel (0) target = $region141
    $region140: #{tpu_custom_call.1} parent=1 // pred_region
      %221 = dma.done [#allocation12], 512
    $region141: #{tpu_custom_call.1} parent=1 // pred_fallthru
      _
    // Predicated region
    $region142: #{tpu_custom_call.1} parent=1 // pred_check
      _
    $region143: #{tpu_custom_call.1} parent=1 // pred_check_branch
      %223 = sbr.rel (0) target = $region145
    $region144: #{tpu_custom_call.1} parent=1 // pred_region
      %225 = dma.done [#allocation15], 512
    $region145: #{tpu_custom_call.1} parent=1 // pred_fallthru
      _
    // Predicated region
    $region146: #{tpu_custom_call.1} parent=1 // pred_check
      _
    $region147: #{tpu_custom_call.1} parent=1 // pred_check_branch
      %227 = sbr.rel (0) target = $region149
    $region148: #{tpu_custom_call.1} parent=1 // pred_region
      %229 = dma.done [#allocation15], 512
    $region149: #{tpu_custom_call.1} parent=1 // pred_fallthru
      _
    %v231 = vld [vmem:[#allocation2] sm:$0xff]
    %v232 = vld [vmem:[#allocation2 + $0x8] sm:$0xff]
    %v233 = vld [vmem:[#allocation5] sm:$0xff]
    %v234 = vld [vmem:[#allocation5 + $0x8] sm:$0xff]
    %v235 = vld [vmem:[%s1] sm:$0xff]
    %v236 = vld [vmem:[%s1 + $0x8] sm:$0xff]
    %v237 = vld [vmem:[%s1 + $0x10] sm:$0xff]
    %v238 = vld [vmem:[%s1 + $0x18] sm:$0xff]
    %v239 = vadd.f32 %v231, %v233
    %v240 = vadd.f32 %v232, %v234
    %v241 = vld [vmem:[%s4] sm:$0xff]
    %v242 = vld [vmem:[%s4 + $0x8] sm:$0xff]
    %v243 = vld [vmem:[%s4 + $0x10] sm:$0xff]
    %v244 = vld [vmem:[%s4 + $0x18] sm:$0xff]
    %v245 = vpack.c.bf16 %v240, %v239
    %v246 = vpack.c.bf16 %v242, %v241
    %v247 = vpack.c.bf16 %v244, %v243
    %v248 = vld [vmem:[%s5] sm:$0x1]
    %v250 = vperm.slane %v248, 0
    %vm252 = vcmask 261120
    %v254 = vsel %vm252, %v245, 0
    %256 = vmatpush.bf16.msra.mxu0 0
    %257 = vmatpush.bf16.msra.mxu0 0
    %258 = vmatpush.bf16.msra.mxu0 0
    %259 = vmatpush.bf16.msra.mxu0 0
    %260 = vmatpush.bf16.msra.mxu0 0
    %261 = vmatpush.bf16.msra.mxu0 0
    %262 = vmatpush.bf16.msra.mxu0 %v247
    %263 = vmatpush.bf16.msra.mxu0 %v246
    %264 = vmatmul.bf16.gmra.mxu0 %v254
    %v265 = vpop.f32.mrf.mxu0
    %v266 = vadd.f32 %v250, %v265
    %v267 = vpop.f32.mrf.mxu0
    %v268 = vadd.f32 %v250, %v267
    %269 = vdwg.mxu0
    %v270 = vld [vmem:[#allocation7] sm:$0xff]
    %v271 = vld [vmem:[#allocation7 + $0x8] sm:$0xff]
    %v272 = vld [vmem:[#allocation7 + $0x10] sm:$0xff]
    %v273 = vld [vmem:[#allocation7 + $0x18] sm:$0xff]
    %v274 = vpack.c.bf16 %v232, %v231
    %v275 = vpack.c.bf16 %v271, %v270
    %v276 = vpack.c.bf16 %v273, %v272
    %v277 = vld [vmem:[%s7] sm:$0x1]
    %v279 = vperm.slane %v277, 0
    %v282 = vsel %vm252, %v274, 0
    %284 = vmatpush.bf16.msra.mxu0 0
    %285 = vmatpush.bf16.msra.mxu0 0
    %286 = vmatpush.bf16.msra.mxu0 0
    %287 = vmatpush.bf16.msra.mxu0 0
    %288 = vmatpush.bf16.msra.mxu0 0
    %289 = vmatpush.bf16.msra.mxu0 0
    %290 = vmatpush.bf16.msra.mxu0 %v276
    %291 = vmatpush.bf16.msra.mxu0 %v275
    %292 = vmatmul.bf16.gmra.mxu0 %v282
    %v293 = vpop.f32.mrf.mxu0
    %v294 = vadd.f32 %v279, %v293
    %v295 = vpop.f32.mrf.mxu0
    %v296 = vadd.f32 %v279, %v295
    %297 = vdwg.mxu0
    %v298 = vpack.c.bf16 %v266, %v266
    %300 = vrot.lane.b32.xlu0 %v298, 96
    %v301 = vpop.permute.xlu0 %300
    %vm302 = vcmask 64512
    %v304 = vsel %vm302, %v298, 0
    %v307 = vsel %vm302, %v301, 0
    %309 = vmatpush.bf16.xpose.msra.mxu0 0
    %310 = vmatpush.bf16.xpose.msra.mxu0 0
    %311 = vmatpush.bf16.xpose.msra.mxu0 0
    %312 = vmatpush.bf16.xpose.msra.mxu0 0
    %313 = vmatpush.bf16.xpose.msra.mxu0 0
    %314 = vmatpush.bf16.xpose.msra.mxu0 0
    %315 = vmatpush.bf16.xpose.msra.mxu0 0
    %316 = vmatpush.bf16.xpose.msra.mxu0 %v307
    %317 = vmatmul.bf16.gmra.mxu0 %v304
    %v318 = vpop.f32.mrf.mxu0
    %v319 = vadd.f32 0.0, %v318
    %v320 = vpop.f32.mrf.mxu0
    %321 = vdwg.mxu0
    %v322 = vsel %vm302, %v319, -inf
    %323 = vmax.xlane.f32.xlu0 %v322
    %v324 = vpop.xlane.xlu0 %323
    %v325 = vsub.f32 %v319, %v324
    %v326 = vmul.f32 %v325, 1.442695
    %v327 = vpow.pop %v326
    %v328 = vsel %vm302, %v327, 0.0
    %329 = vadd.xlane.f32.xlu0 %v328
    %v330 = vpop.xlane.xlu0 %329
    %v331 = vrcp.pop %v330
    %v332 = vmul.f32 %v327, %v331
    %v333 = vpack.c.bf16 %v332, %v332
    %v334 = vpack.c.bf16 %v294, %v294
    %v336 = vsel %vm302, %v333, 0
    %vm338 = vcmask 1043456
    %v340 = vsel %vm338, %v334, 0
    %342 = vmatpush.bf16.msra.mxu0 0
    %343 = vmatpush.bf16.msra.mxu0 0
    %344 = vmatpush.bf16.msra.mxu0 0
    %345 = vmatpush.bf16.msra.mxu0 0
    %346 = vmatpush.bf16.msra.mxu0 0
    %347 = vmatpush.bf16.msra.mxu0 0
    %348 = vmatpush.bf16.msra.mxu0 0
    %349 = vmatpush.bf16.msra.mxu0 %v340
    %350 = vmatmul.bf16.gmra.mxu0 %v336
    %v351 = vpop.f32.mrf.mxu0
    %v352 = vadd.f32 0.0, %v351
    %v353 = vpop.f32.mrf.mxu0
    %354 = vdwg.mxu0
    %355 = vrot.lane.b32.xlu0 %v298, 120
    %v356 = vpop.permute.xlu0 %355
    %357 = vrot.lane.b32.xlu0 %v298, 88
    %v358 = vpop.permute.xlu0 %357
    %v360 = vsel %vm302, %v356, 0
    %v363 = vsel %vm302, %v358, 0
    %365 = vmatpush.bf16.xpose.msra.mxu0 0
    %366 = vmatpush.bf16.xpose.msra.mxu0 0
    %367 = vmatpush.bf16.xpose.msra.mxu0 0
    %368 = vmatpush.bf16.xpose.msra.mxu0 0
    %369 = vmatpush.bf16.xpose.msra.mxu0 0
    %370 = vmatpush.bf16.xpose.msra.mxu0 0
    %371 = vmatpush.bf16.xpose.msra.mxu0 0
    %372 = vmatpush.bf16.xpose.msra.mxu0 %v363
    %373 = vmatmul.bf16.gmra.mxu0 %v360
    %v374 = vpop.f32.mrf.mxu0
    %v375 = vadd.f32 0.0, %v374
    %v376 = vpop.f32.mrf.mxu0
    %377 = vdwg.mxu0
    %v378 = vsel %vm302, %v375, -inf
    %379 = vmax.xlane.f32.xlu0 %v378
    %v380 = vpop.xlane.xlu0 %379
    %v381 = vsub.f32 %v375, %v380
    %v382 = vmul.f32 %v381, 1.442695
    %v383 = vpow.pop %v382
    %v384 = vsel %vm302, %v383, 0.0
    %385 = vadd.xlane.f32.xlu0 %v384
    %v386 = vpop.xlane.xlu0 %385
    %v387 = vrcp.pop %v386
    %v388 = vmul.f32 %v383, %v387
    %v389 = vpack.c.bf16 %v388, %v388
    %391 = vrot.lane.b32.xlu0 %v334, 120
    %v392 = vpop.permute.xlu0 %391
    %v394 = vsel %vm302, %v389, 0
    %v397 = vsel %vm338, %v392, 0
    %399 = vmatpush.bf16.msra.mxu0 0
    %400 = vmatpush.bf16.msra.mxu0 0
    %401 = vmatpush.bf16.msra.mxu0 0
    %402 = vmatpush.bf16.msra.mxu0 0
    %403 = vmatpush.bf16.msra.mxu0 0
    %404 = vmatpush.bf16.msra.mxu0 0
    %405 = vmatpush.bf16.msra.mxu0 0
    %406 = vmatpush.bf16.msra.mxu0 %v397
    %407 = vmatmul.bf16.gmra.mxu0 %v394
    %v408 = vpop.f32.mrf.mxu0
    %v409 = vadd.f32 0.0, %v408
    %v410 = vpop.f32.mrf.mxu0
    %411 = vdwg.mxu0
    %412 = vrot.lane.b32.xlu0 %v298, 112
    %v413 = vpop.permute.xlu0 %412
    %414 = vrot.lane.b32.xlu0 %v298, 80
    %v415 = vpop.permute.xlu0 %414
    %v417 = vsel %vm302, %v413, 0
    %v420 = vsel %vm302, %v415, 0
    %422 = vmatpush.bf16.xpose.msra.mxu0 0
    %423 = vmatpush.bf16.xpose.msra.mxu0 0
    %424 = vmatpush.bf16.xpose.msra.mxu0 0
    %425 = vmatpush.bf16.xpose.msra.mxu0 0
    %426 = vmatpush.bf16.xpose.msra.mxu0 0
    %427 = vmatpush.bf16.xpose.msra.mxu0 0
    %428 = vmatpush.bf16.xpose.msra.mxu0 0
    %429 = vmatpush.bf16.xpose.msra.mxu0 %v420
    %430 = vmatmul.bf16.gmra.mxu0 %v417
    %v431 = vpop.f32.mrf.mxu0
    %v432 = vadd.f32 0.0, %v431
    %v433 = vpop.f32.mrf.mxu0
    %434 = vdwg.mxu0
    %v435 = vsel %vm302, %v432, -inf
    %436 = vmax.xlane.f32.xlu0 %v435
    %v437 = vpop.xlane.xlu0 %436
    %v438 = vsub.f32 %v432, %v437
    %v439 = vmul.f32 %v438, 1.442695
    %v440 = vpow.pop %v439
    %v441 = vsel %vm302, %v440, 0.0
    %442 = vadd.xlane.f32.xlu0 %v441
    %v443 = vpop.xlane.xlu0 %442
    %v444 = vrcp.pop %v443
    %v445 = vmul.f32 %v440, %v444
    %v446 = vpack.c.bf16 %v445, %v445
    %447 = vrot.lane.b32.xlu0 %v334, 112
    %v448 = vpop.permute.xlu0 %447
    %v450 = vsel %vm302, %v446, 0
    %v453 = vsel %vm338, %v448, 0
    %455 = vmatpush.bf16.msra.mxu0 0
    %456 = vmatpush.bf16.msra.mxu0 0
    %457 = vmatpush.bf16.msra.mxu0 0
    %458 = vmatpush.bf16.msra.mxu0 0
    %459 = vmatpush.bf16.msra.mxu0 0
    %460 = vmatpush.bf16.msra.mxu0 0
    %461 = vmatpush.bf16.msra.mxu0 0
    %462 = vmatpush.bf16.msra.mxu0 %v453
    %463 = vmatmul.bf16.gmra.mxu0 %v450
    %v464 = vpop.f32.mrf.mxu0
    %v465 = vadd.f32 0.0, %v464
    %v466 = vpop.f32.mrf.mxu0
    %467 = vdwg.mxu0
    %468 = vrot.lane.b32.xlu0 %v298, 104
    %v469 = vpop.permute.xlu0 %468
    %470 = vrot.lane.b32.xlu0 %v298, 72
    %v471 = vpop.permute.xlu0 %470
    %v473 = vsel %vm302, %v469, 0
    %v476 = vsel %vm302, %v471, 0
    %478 = vmatpush.bf16.xpose.msra.mxu0 0
    %479 = vmatpush.bf16.xpose.msra.mxu0 0
    %480 = vmatpush.bf16.xpose.msra.mxu0 0
    %481 = vmatpush.bf16.xpose.msra.mxu0 0
    %482 = vmatpush.bf16.xpose.msra.mxu0 0
    %483 = vmatpush.bf16.xpose.msra.mxu0 0
    %484 = vmatpush.bf16.xpose.msra.mxu0 0
    %485 = vmatpush.bf16.xpose.msra.mxu0 %v476
    %486 = vmatmul.bf16.gmra.mxu0 %v473
    %v487 = vpop.f32.mrf.mxu0
    %v488 = vadd.f32 0.0, %v487
    %v489 = vpop.f32.mrf.mxu0
    %490 = vdwg.mxu0
    %v491 = vsel %vm302, %v488, -inf
    %492 = vmax.xlane.f32.xlu0 %v491
    %v493 = vpop.xlane.xlu0 %492
    %v494 = vsub.f32 %v488, %v493
    %v495 = vmul.f32 %v494, 1.442695
    %v496 = vpow.pop %v495
    %v497 = vsel %vm302, %v496, 0.0
    %498 = vadd.xlane.f32.xlu0 %v497
    %v499 = vpop.xlane.xlu0 %498
    %v500 = vrcp.pop %v499
    %v501 = vmul.f32 %v496, %v500
    %v502 = vpack.c.bf16 %v501, %v501
    %503 = vrot.lane.b32.xlu0 %v334, 104
    %v504 = vpop.permute.xlu0 %503
    %v506 = vsel %vm302, %v502, 0
    %v509 = vsel %vm338, %v504, 0
    %511 = vmatpush.bf16.msra.mxu0 0
    %512 = vmatpush.bf16.msra.mxu0 0
    %513 = vmatpush.bf16.msra.mxu0 0
    %514 = vmatpush.bf16.msra.mxu0 0
    %515 = vmatpush.bf16.msra.mxu0 0
    %516 = vmatpush.bf16.msra.mxu0 0
    %517 = vmatpush.bf16.msra.mxu0 0
    %518 = vmatpush.bf16.msra.mxu0 %v509
    %519 = vmatmul.bf16.gmra.mxu0 %v506
    %v520 = vpop.f32.mrf.mxu0
    %v521 = vadd.f32 0.0, %v520
    %v522 = vpop.f32.mrf.mxu0
    %523 = vdwg.mxu0
    %525 = vrot.lane.b32.xlu0 %v409, 8
    %v526 = vpop.permute.xlu0 %525
    %529 = vrot.lane.b32.xlu0 %v465, 16
    %v530 = vpop.permute.xlu0 %529
    %533 = vrot.lane.b32.xlu0 %v521, 24
    %v534 = vpop.permute.xlu0 %533
    %v536 = vsel %vm302, %v352, %v526
    %vm537 = vcmask 130048
    %v538 = vsel %vm537, %v536, %v530
    %vm539 = vcmask 195584
    %v540 = vsel %vm539, %v538, %v534
    %v541 = vpack.c.bf16 %v268, %v268
    %543 = vrot.lane.b32.xlu0 %v541, 96
    %v544 = vpop.permute.xlu0 %543
    %v546 = vsel %vm302, %v541, 0
    %v549 = vsel %vm302, %v544, 0
    %551 = vmatpush.bf16.xpose.msra.mxu0 0
    %552 = vmatpush.bf16.xpose.msra.mxu0 0
    %553 = vmatpush.bf16.xpose.msra.mxu0 0
    %554 = vmatpush.bf16.xpose.msra.mxu0 0
    %555 = vmatpush.bf16.xpose.msra.mxu0 0
    %556 = vmatpush.bf16.xpose.msra.mxu0 0
    %557 = vmatpush.bf16.xpose.msra.mxu0 0
    %558 = vmatpush.bf16.xpose.msra.mxu0 %v549
    %559 = vmatmul.bf16.gmra.mxu0 %v546
    %v560 = vpop.f32.mrf.mxu0
    %v561 = vadd.f32 0.0, %v560
    %v562 = vpop.f32.mrf.mxu0
    %563 = vdwg.mxu0
    %v564 = vsel %vm302, %v561, -inf
    %565 = vmax.xlane.f32.xlu0 %v564
    %v566 = vpop.xlane.xlu0 %565
    %v567 = vsub.f32 %v561, %v566
    %v568 = vmul.f32 %v567, 1.442695
    %v569 = vpow.pop %v568
    %v570 = vsel %vm302, %v569, 0.0
    %571 = vadd.xlane.f32.xlu0 %v570
    %v572 = vpop.xlane.xlu0 %571
    %v573 = vrcp.pop %v572
    %v574 = vmul.f32 %v569, %v573
    %v575 = vpack.c.bf16 %v574, %v574
    %v576 = vpack.c.bf16 %v296, %v296
    %v578 = vsel %vm302, %v575, 0
    %v581 = vsel %vm338, %v576, 0
    %583 = vmatpush.bf16.msra.mxu0 0
    %584 = vmatpush.bf16.msra.mxu0 0
    %585 = vmatpush.bf16.msra.mxu0 0
    %586 = vmatpush.bf16.msra.mxu0 0
    %587 = vmatpush.bf16.msra.mxu0 0
    %588 = vmatpush.bf16.msra.mxu0 0
    %589 = vmatpush.bf16.msra.mxu0 0
    %590 = vmatpush.bf16.msra.mxu0 %v581
    %591 = vmatmul.bf16.gmra.mxu0 %v578
    %v592 = vpop.f32.mrf.mxu0
    %v593 = vadd.f32 0.0, %v592
    %v594 = vpop.f32.mrf.mxu0
    %595 = vdwg.mxu0
    %596 = vrot.lane.b32.xlu0 %v541, 120
    %v597 = vpop.permute.xlu0 %596
    %598 = vrot.lane.b32.xlu0 %v541, 88
    %v599 = vpop.permute.xlu0 %598
    %v601 = vsel %vm302, %v597, 0
    %v604 = vsel %vm302, %v599, 0
    %606 = vmatpush.bf16.xpose.msra.mxu0 0
    %607 = vmatpush.bf16.xpose.msra.mxu0 0
    %608 = vmatpush.bf16.xpose.msra.mxu0 0
    %609 = vmatpush.bf16.xpose.msra.mxu0 0
    %610 = vmatpush.bf16.xpose.msra.mxu0 0
    %611 = vmatpush.bf16.xpose.msra.mxu0 0
    %612 = vmatpush.bf16.xpose.msra.mxu0 0
    %613 = vmatpush.bf16.xpose.msra.mxu0 %v604
    %614 = vmatmul.bf16.gmra.mxu0 %v601
    %v615 = vpop.f32.mrf.mxu0
    %v616 = vadd.f32 0.0, %v615
    %v617 = vpop.f32.mrf.mxu0
    %618 = vdwg.mxu0
    %v619 = vsel %vm302, %v616, -inf
    %620 = vmax.xlane.f32.xlu0 %v619
    %v621 = vpop.xlane.xlu0 %620
    %v622 = vsub.f32 %v616, %v621
    %v623 = vmul.f32 %v622, 1.442695
    %v624 = vpow.pop %v623
    %v625 = vsel %vm302, %v624, 0.0
    %626 = vadd.xlane.f32.xlu0 %v625
    %v627 = vpop.xlane.xlu0 %626
    %v628 = vrcp.pop %v627
    %v629 = vmul.f32 %v624, %v628
    %v630 = vpack.c.bf16 %v629, %v629
    %632 = vrot.lane.b32.xlu0 %v576, 120
    %v633 = vpop.permute.xlu0 %632
    %v635 = vsel %vm302, %v630, 0
    %v638 = vsel %vm338, %v633, 0
    %640 = vmatpush.bf16.msra.mxu0 0
    %641 = vmatpush.bf16.msra.mxu0 0
    %642 = vmatpush.bf16.msra.mxu0 0
    %643 = vmatpush.bf16.msra.mxu0 0
    %644 = vmatpush.bf16.msra.mxu0 0
    %645 = vmatpush.bf16.msra.mxu0 0
    %646 = vmatpush.bf16.msra.mxu0 0
    %647 = vmatpush.bf16.msra.mxu0 %v638
    %648 = vmatmul.bf16.gmra.mxu0 %v635
    %v649 = vpop.f32.mrf.mxu0
    %v650 = vadd.f32 0.0, %v649
    %v651 = vpop.f32.mrf.mxu0
    %652 = vdwg.mxu0
    %653 = vrot.lane.b32.xlu0 %v541, 112
    %v654 = vpop.permute.xlu0 %653
    %655 = vrot.lane.b32.xlu0 %v541, 80
    %v656 = vpop.permute.xlu0 %655
    %v658 = vsel %vm302, %v654, 0
    %v661 = vsel %vm302, %v656, 0
    %663 = vmatpush.bf16.xpose.msra.mxu0 0
    %664 = vmatpush.bf16.xpose.msra.mxu0 0
    %665 = vmatpush.bf16.xpose.msra.mxu0 0
    %666 = vmatpush.bf16.xpose.msra.mxu0 0
    %667 = vmatpush.bf16.xpose.msra.mxu0 0
    %668 = vmatpush.bf16.xpose.msra.mxu0 0
    %669 = vmatpush.bf16.xpose.msra.mxu0 0
    %670 = vmatpush.bf16.xpose.msra.mxu0 %v661
    %671 = vmatmul.bf16.gmra.mxu0 %v658
    %v672 = vpop.f32.mrf.mxu0
    %v673 = vadd.f32 0.0, %v672
    %v674 = vpop.f32.mrf.mxu0
    %675 = vdwg.mxu0
    %v676 = vsel %vm302, %v673, -inf
    %677 = vmax.xlane.f32.xlu0 %v676
    %v678 = vpop.xlane.xlu0 %677
    %v679 = vsub.f32 %v673, %v678
    %v680 = vmul.f32 %v679, 1.442695
    %v681 = vpow.pop %v680
    %v682 = vsel %vm302, %v681, 0.0
    %683 = vadd.xlane.f32.xlu0 %v682
    %v684 = vpop.xlane.xlu0 %683
    %v685 = vrcp.pop %v684
    %v686 = vmul.f32 %v681, %v685
    %v687 = vpack.c.bf16 %v686, %v686
    %688 = vrot.lane.b32.xlu0 %v576, 112
    %v689 = vpop.permute.xlu0 %688
    %v691 = vsel %vm302, %v687, 0
    %v694 = vsel %vm338, %v689, 0
    %696 = vmatpush.bf16.msra.mxu0 0
    %697 = vmatpush.bf16.msra.mxu0 0
    %698 = vmatpush.bf16.msra.mxu0 0
    %699 = vmatpush.bf16.msra.mxu0 0
    %700 = vmatpush.bf16.msra.mxu0 0
    %701 = vmatpush.bf16.msra.mxu0 0
    %702 = vmatpush.bf16.msra.mxu0 0
    %703 = vmatpush.bf16.msra.mxu0 %v694
    %704 = vmatmul.bf16.gmra.mxu0 %v691
    %v705 = vpop.f32.mrf.mxu0
    %v706 = vadd.f32 0.0, %v705
    %v707 = vpop.f32.mrf.mxu0
    %708 = vdwg.mxu0
    %709 = vrot.lane.b32.xlu0 %v541, 104
    %v710 = vpop.permute.xlu0 %709
    %711 = vrot.lane.b32.xlu0 %v541, 72
    %v712 = vpop.permute.xlu0 %711
    %v714 = vsel %vm302, %v710, 0
    %v717 = vsel %vm302, %v712, 0
    %719 = vmatpush.bf16.xpose.msra.mxu0 0
    %720 = vmatpush.bf16.xpose.msra.mxu0 0
    %721 = vmatpush.bf16.xpose.msra.mxu0 0
    %722 = vmatpush.bf16.xpose.msra.mxu0 0
    %723 = vmatpush.bf16.xpose.msra.mxu0 0
    %724 = vmatpush.bf16.xpose.msra.mxu0 0
    %725 = vmatpush.bf16.xpose.msra.mxu0 0
    %726 = vmatpush.bf16.xpose.msra.mxu0 %v717
    %727 = vmatmul.bf16.gmra.mxu0 %v714
    %v728 = vpop.f32.mrf.mxu0
    %v729 = vadd.f32 0.0, %v728
    %v730 = vpop.f32.mrf.mxu0
    %731 = vdwg.mxu0
    %v732 = vsel %vm302, %v729, -inf
    %733 = vmax.xlane.f32.xlu0 %v732
    %v734 = vpop.xlane.xlu0 %733
    %v735 = vsub.f32 %v729, %v734
    %v736 = vmul.f32 %v735, 1.442695
    %v737 = vpow.pop %v736
    %v738 = vsel %vm302, %v737, 0.0
    %739 = vadd.xlane.f32.xlu0 %v738
    %v740 = vpop.xlane.xlu0 %739
    %v741 = vrcp.pop %v740
    %v742 = vmul.f32 %v737, %v741
    %v743 = vpack.c.bf16 %v742, %v742
    %744 = vrot.lane.b32.xlu0 %v576, 104
    %v745 = vpop.permute.xlu0 %744
    %v747 = vsel %vm302, %v743, 0
    %v750 = vsel %vm338, %v745, 0
    %752 = vmatpush.bf16.msra.mxu0 0
    %753 = vmatpush.bf16.msra.mxu0 0
    %754 = vmatpush.bf16.msra.mxu0 0
    %755 = vmatpush.bf16.msra.mxu0 0
    %756 = vmatpush.bf16.msra.mxu0 0
    %757 = vmatpush.bf16.msra.mxu0 0
    %758 = vmatpush.bf16.msra.mxu0 0
    %759 = vmatpush.bf16.msra.mxu0 %v750
    %760 = vmatmul.bf16.gmra.mxu0 %v747
    %v761 = vpop.f32.mrf.mxu0
    %v762 = vadd.f32 0.0, %v761
    %v763 = vpop.f32.mrf.mxu0
    %764 = vdwg.mxu0
    %766 = vrot.lane.b32.xlu0 %v650, 8
    %v767 = vpop.permute.xlu0 %766
    %770 = vrot.lane.b32.xlu0 %v706, 16
    %v771 = vpop.permute.xlu0 %770
    %774 = vrot.lane.b32.xlu0 %v762, 24
    %v775 = vpop.permute.xlu0 %774
    %v777 = vsel %vm302, %v593, %v767
    %v778 = vsel %vm537, %v777, %v771
    %v779 = vsel %vm539, %v778, %v775
    %v780 = vld [vmem:[#allocation8] sm:$0xff]
    %v781 = vld [vmem:[#allocation8 + $0x8] sm:$0xff]
    %v782 = vld [vmem:[#allocation8 + $0x10] sm:$0xff]
    %v783 = vld [vmem:[#allocation8 + $0x18] sm:$0xff]
    %v784 = vpack.c.bf16 %v779, %v540
    %v785 = vpack.c.bf16 %v781, %v780
    %v786 = vpack.c.bf16 %v783, %v782
    %v787 = vld [vmem:[%s9] sm:$0x1]
    %v789 = vperm.slane %v787, 0
    %v792 = vsel %vm252, %v784, 0
    %794 = vmatpush.bf16.msra.mxu0 0
    %795 = vmatpush.bf16.msra.mxu0 0
    %796 = vmatpush.bf16.msra.mxu0 0
    %797 = vmatpush.bf16.msra.mxu0 0
    %798 = vmatpush.bf16.msra.mxu0 0
    %799 = vmatpush.bf16.msra.mxu0 0
    %800 = vmatpush.bf16.msra.mxu0 %v786
    %801 = vmatpush.bf16.msra.mxu0 %v785
    %802 = vmatmul.bf16.gmra.mxu0 %v792
    %v803 = vpop.f32.mrf.mxu0
    %v804 = vadd.f32 %v789, %v803
    %v805 = vpop.f32.mrf.mxu0
    %v806 = vadd.f32 %v789, %v805
    %807 = vdwg.mxu0
    %v808 = vadd.f32 %v231, %v804
    %v809 = vadd.f32 %v232, %v806
    %v810 = vld [vmem:[%s22] sm:$0x1]
    %v811 = vld [vmem:[%s23] sm:$0x1]
    %v812 = vsel %vm252, %v808, 0.0
    %813 = vadd.xlane.f32.xlu0 %v812
    %v814 = vpop.xlane.xlu0 %813
    %v815 = vsel %vm252, %v809, 0.0
    %816 = vadd.xlane.f32.xlu0 %v815
    %v817 = vpop.xlane.xlu0 %816
    %v818 = vrcp.pop 32.0
    %v819 = vmul.f32 32.0, %v818
    %v820 = vsub.f32 1.0, %v819
    %v821 = vmul.f32 %v818, %v820
    %v822 = vadd.f32 %v818, %v821
    %vm823 = vweird.f32 %v818
    %v824 = vsel %vm823, %v818, %v822
    %v825 = vmul.f32 %v814, %v824
    %v826 = vmul.f32 %v817, %v824
    %v827 = vsub.f32 %v808, %v825
    %v828 = vsub.f32 %v809, %v826
    %v829 = vmul.f32 %v827, %v827
    %v830 = vmul.f32 %v828, %v828
    %v831 = vsel %vm252, %v829, 0.0
    %832 = vadd.xlane.f32.xlu0 %v831
    %v833 = vpop.xlane.xlu0 %832
    %v834 = vsel %vm252, %v830, 0.0
    %835 = vadd.xlane.f32.xlu0 %v834
    %v836 = vpop.xlane.xlu0 %835
    %v837 = vmul.f32 %v833, %v824
    %v838 = vmul.f32 %v836, %v824
    %v839 = vadd.f32 %v837, 1e-05
    %v840 = vadd.f32 %v838, 1e-05
    %v841 = vrsqrt.pop %v839
    %v842 = vmul.f32 %v841, %v839
    %v843 = vmul.f32 %v842, %v841
    %v844 = vmul.f32 0.5, %v843
    %v845 = vsub.f32 1.5, %v844
    %v846 = vmul.f32 %v841, %v845
    %vm847 = vweird.f32 %v839
    %vm848 = vweird.f32 %v841
    %vm849 = vmor %vm847, %vm848
    %v850 = vsel %vm849, %v841, %v846
    %v851 = vrsqrt.pop %v840
    %v852 = vmul.f32 %v851, %v840
    %v853 = vmul.f32 %v852, %v851
    %v854 = vmul.f32 0.5, %v853
    %v855 = vsub.f32 1.5, %v854
    %v856 = vmul.f32 %v851, %v855
    %vm857 = vweird.f32 %v840
    %vm858 = vweird.f32 %v851
    %vm859 = vmor %vm857, %vm858
    %v860 = vsel %vm859, %v851, %v856
    %v861 = vmul.f32 %v827, %v850
    %v862 = vmul.f32 %v828, %v860
    %v864 = vperm.slane %v810, 0
    %v866 = vmul.f32 %v861, %v864
    %v867 = vmul.f32 %v862, %v864
    %v869 = vperm.slane %v811, 0
    %v871 = vadd.f32 %v866, %v869
    %v872 = vadd.f32 %v867, %v869
    %v873 = vadd.f32 %v871, %v233
    %v874 = vadd.f32 %v872, %v234
    %v875 = vld [vmem:[#allocation10] sm:$0xff]
    %v876 = vld [vmem:[#allocation10 + $0x8] sm:$0xff]
    %v877 = vld [vmem:[#allocation10 + $0x10] sm:$0xff]
    %v878 = vld [vmem:[#allocation10 + $0x18] sm:$0xff]
    %v879 = vpack.c.bf16 %v874, %v873
    %v880 = vpack.c.bf16 %v876, %v875
    %v881 = vpack.c.bf16 %v878, %v877
    %v882 = vld [vmem:[%s11] sm:$0x1]
    %v884 = vperm.slane %v882, 0
    %v887 = vsel %vm252, %v879, 0
    %889 = vmatpush.bf16.msra.mxu0 0
    %890 = vmatpush.bf16.msra.mxu0 0
    %891 = vmatpush.bf16.msra.mxu0 0
    %892 = vmatpush.bf16.msra.mxu0 0
    %893 = vmatpush.bf16.msra.mxu0 0
    %894 = vmatpush.bf16.msra.mxu0 0
    %895 = vmatpush.bf16.msra.mxu0 %v881
    %896 = vmatpush.bf16.msra.mxu0 %v880
    %897 = vmatmul.bf16.gmra.mxu0 %v887
    %v898 = vpop.f32.mrf.mxu0
    %v899 = vadd.f32 %v884, %v898
    %v900 = vpop.f32.mrf.mxu0
    %v901 = vadd.f32 %v884, %v900
    %902 = vdwg.mxu0
    %v903 = vld [vmem:[%s2] sm:$0xff]
    %v904 = vld [vmem:[%s2 + $0x8] sm:$0xff]
    %v905 = vld [vmem:[%s2 + $0x10] sm:$0xff]
    %v906 = vld [vmem:[%s2 + $0x18] sm:$0xff]
    %v907 = vadd.f32 %v235, %v903
    %v908 = vadd.f32 %v236, %v904
    %v909 = vadd.f32 %v237, %v905
    %v910 = vadd.f32 %v238, %v906
    %v911 = vld [vmem:[#allocation11] sm:$0xff]
    %v912 = vld [vmem:[#allocation11 + $0x8] sm:$0xff]
    %v913 = vld [vmem:[#allocation11 + $0x10] sm:$0xff]
    %v914 = vld [vmem:[#allocation11 + $0x18] sm:$0xff]
    %v915 = vpack.c.bf16 %v908, %v907
    %v916 = vpack.c.bf16 %v910, %v909
    %v917 = vpack.c.bf16 %v912, %v911
    %v918 = vpack.c.bf16 %v914, %v913
    %v919 = vld [vmem:[%s13] sm:$0x1]
    %v921 = vperm.slane %v919, 0
    %v924 = vsel %vm252, %v915, 0
    %v927 = vsel %vm252, %v916, 0
    %929 = vmatpush.bf16.msra.mxu0 0
    %930 = vmatpush.bf16.msra.mxu0 0
    %931 = vmatpush.bf16.msra.mxu0 0
    %932 = vmatpush.bf16.msra.mxu0 0
    %933 = vmatpush.bf16.msra.mxu0 0
    %934 = vmatpush.bf16.msra.mxu0 0
    %935 = vmatpush.bf16.msra.mxu0 %v918
    %936 = vmatpush.bf16.msra.mxu0 %v917
    %937 = vmatmul.bf16.gmra.mxu0 %v924
    %v938 = vpop.f32.mrf.mxu0
    %v939 = vadd.f32 %v921, %v938
    %v940 = vpop.f32.mrf.mxu0
    %v941 = vadd.f32 %v921, %v940
    %942 = vmatmul.bf16.gmra.mxu0 %v927
    %v943 = vpop.f32.mrf.mxu0
    %v944 = vadd.f32 %v921, %v943
    %v945 = vpop.f32.mrf.mxu0
    %v946 = vadd.f32 %v921, %v945
    %947 = vdwg.mxu0
    %v948 = vld [vmem:[#allocation13] sm:$0xff]
    %v949 = vld [vmem:[#allocation13 + $0x8] sm:$0xff]
    %v950 = vld [vmem:[#allocation13 + $0x10] sm:$0xff]
    %v951 = vld [vmem:[#allocation13 + $0x18] sm:$0xff]
    %v952 = vpack.c.bf16 %v236, %v235
    %v953 = vpack.c.bf16 %v238, %v237
    %v954 = vpack.c.bf16 %v949, %v948
    %v955 = vpack.c.bf16 %v951, %v950
    %v956 = vld [vmem:[%s15] sm:$0x1]
    %v958 = vperm.slane %v956, 0
    %v961 = vsel %vm252, %v952, 0
    %v964 = vsel %vm252, %v953, 0
    %966 = vmatpush.bf16.msra.mxu0 0
    %967 = vmatpush.bf16.msra.mxu0 0
    %968 = vmatpush.bf16.msra.mxu0 0
    %969 = vmatpush.bf16.msra.mxu0 0
    %970 = vmatpush.bf16.msra.mxu0 0
    %971 = vmatpush.bf16.msra.mxu0 0
    %972 = vmatpush.bf16.msra.mxu0 %v955
    %973 = vmatpush.bf16.msra.mxu0 %v954
    %974 = vmatmul.bf16.gmra.mxu0 %v961
    %v975 = vpop.f32.mrf.mxu0
    %v976 = vadd.f32 %v958, %v975
    %v977 = vpop.f32.mrf.mxu0
    %v978 = vadd.f32 %v958, %v977
    %979 = vmatmul.bf16.gmra.mxu0 %v964
    %v980 = vpop.f32.mrf.mxu0
    %v981 = vadd.f32 %v958, %v980
    %v982 = vpop.f32.mrf.mxu0
    %v983 = vadd.f32 %v958, %v982
    %984 = vdwg.mxu0
    %v985 = vpack.c.bf16 %v899, %v899
    %v986 = vpack.c.bf16 %v941, %v939
    %v988 = vsel %vm302, %v985, 0
    %v991 = vsel %vm302, %v986, 0
    %993 = vmatpush.bf16.xpose.msra.mxu0 0
    %994 = vmatpush.bf16.xpose.msra.mxu0 0
    %995 = vmatpush.bf16.xpose.msra.mxu0 0
    %996 = vmatpush.bf16.xpose.msra.mxu0 0
    %997 = vmatpush.bf16.xpose.msra.mxu0 0
    %998 = vmatpush.bf16.xpose.msra.mxu0 0
    %999 = vmatpush.bf16.xpose.msra.mxu0 0
    %1000 = vmatpush.bf16.xpose.msra.mxu0 %v991
    %1001 = vmatmul.bf16.gmra.mxu0 %v988
    %v1002 = vpop.f32.mrf.mxu0
    %v1003 = vadd.f32 0.0, %v1002
    %v1004 = vpop.f32.mrf.mxu0
    %1005 = vdwg.mxu0
    %v1006 = vsel %vm537, %v1003, -inf
    %1007 = vmax.xlane.f32.xlu0 %v1006
    %v1008 = vpop.xlane.xlu0 %1007
    %v1009 = vsub.f32 %v1003, %v1008
    %v1010 = vmul.f32 %v1009, 1.442695
    %v1011 = vpow.pop %v1010
    %v1012 = vsel %vm537, %v1011, 0.0
    %1013 = vadd.xlane.f32.xlu0 %v1012
    %v1014 = vpop.xlane.xlu0 %1013
    %v1015 = vrcp.pop %v1014
    %v1016 = vmul.f32 %v1011, %v1015
    %v1017 = vpack.c.bf16 %v1016, %v1016
    %v1018 = vpack.c.bf16 %v978, %v976
    %v1020 = vsel %vm537, %v1017, 0
    %1022 = vmatpush.bf16.msra.mxu0 0
    %1023 = vmatpush.bf16.msra.mxu0 0
    %1024 = vmatpush.bf16.msra.mxu0 0
    %1025 = vmatpush.bf16.msra.mxu0 0
    %1026 = vmatpush.bf16.msra.mxu0 0
    %1027 = vmatpush.bf16.msra.mxu0 0
    %1028 = vmatpush.bf16.msra.mxu0 0
    %1029 = vmatpush.bf16.msra.mxu0 %v1018
    %1030 = vmatmul.bf16.gmra.mxu0 %v1020
    %v1031 = vpop.f32.mrf.mxu0
    %v1032 = vadd.f32 0.0, %v1031
    %v1033 = vpop.f32.mrf.mxu0
    %1034 = vdwg.mxu0
    %1036 = vrot.lane.b32.xlu0 %v985, 120
    %v1037 = vpop.permute.xlu0 %1036
    %1039 = vrot.lane.b32.xlu0 %v986, 120
    %v1040 = vpop.permute.xlu0 %1039
    %v1042 = vsel %vm302, %v1037, 0
    %v1045 = vsel %vm302, %v1040, 0
    %1047 = vmatpush.bf16.xpose.msra.mxu0 0
    %1048 = vmatpush.bf16.xpose.msra.mxu0 0
    %1049 = vmatpush.bf16.xpose.msra.mxu0 0
    %1050 = vmatpush.bf16.xpose.msra.mxu0 0
    %1051 = vmatpush.bf16.xpose.msra.mxu0 0
    %1052 = vmatpush.bf16.xpose.msra.mxu0 0
    %1053 = vmatpush.bf16.xpose.msra.mxu0 0
    %1054 = vmatpush.bf16.xpose.msra.mxu0 %v1045
    %1055 = vmatmul.bf16.gmra.mxu0 %v1042
    %v1056 = vpop.f32.mrf.mxu0
    %v1057 = vadd.f32 0.0, %v1056
    %v1058 = vpop.f32.mrf.mxu0
    %1059 = vdwg.mxu0
    %v1060 = vsel %vm537, %v1057, -inf
    %1061 = vmax.xlane.f32.xlu0 %v1060
    %v1062 = vpop.xlane.xlu0 %1061
    %v1063 = vsub.f32 %v1057, %v1062
    %v1064 = vmul.f32 %v1063, 1.442695
    %v1065 = vpow.pop %v1064
    %v1066 = vsel %vm537, %v1065, 0.0
    %1067 = vadd.xlane.f32.xlu0 %v1066
    %v1068 = vpop.xlane.xlu0 %1067
    %v1069 = vrcp.pop %v1068
    %v1070 = vmul.f32 %v1065, %v1069
    %v1071 = vpack.c.bf16 %v1070, %v1070
    %1073 = vrot.lane.b32.xlu0 %v1018, 120
    %v1074 = vpop.permute.xlu0 %1073
    %v1077 = vsel %vm537, %v1071, 0
    %1079 = vmatpush.bf16.msra.mxu0 0
    %1080 = vmatpush.bf16.msra.mxu0 0
    %1081 = vmatpush.bf16.msra.mxu0 0
    %1082 = vmatpush.bf16.msra.mxu0 0
    %1083 = vmatpush.bf16.msra.mxu0 0
    %1084 = vmatpush.bf16.msra.mxu0 0
    %1085 = vmatpush.bf16.msra.mxu0 0
    %1086 = vmatpush.bf16.msra.mxu0 %v1074
    %1087 = vmatmul.bf16.gmra.mxu0 %v1077
    %v1088 = vpop.f32.mrf.mxu0
    %v1089 = vadd.f32 0.0, %v1088
    %v1090 = vpop.f32.mrf.mxu0
    %1091 = vdwg.mxu0
    %1092 = vrot.lane.b32.xlu0 %v985, 112
    %v1093 = vpop.permute.xlu0 %1092
    %1094 = vrot.lane.b32.xlu0 %v986, 112
    %v1095 = vpop.permute.xlu0 %1094
    %v1097 = vsel %vm302, %v1093, 0
    %v1100 = vsel %vm302, %v1095, 0
    %1102 = vmatpush.bf16.xpose.msra.mxu0 0
    %1103 = vmatpush.bf16.xpose.msra.mxu0 0
    %1104 = vmatpush.bf16.xpose.msra.mxu0 0
    %1105 = vmatpush.bf16.xpose.msra.mxu0 0
    %1106 = vmatpush.bf16.xpose.msra.mxu0 0
    %1107 = vmatpush.bf16.xpose.msra.mxu0 0
    %1108 = vmatpush.bf16.xpose.msra.mxu0 0
    %1109 = vmatpush.bf16.xpose.msra.mxu0 %v1100
    %1110 = vmatmul.bf16.gmra.mxu0 %v1097
    %v1111 = vpop.f32.mrf.mxu0
    %v1112 = vadd.f32 0.0, %v1111
    %v1113 = vpop.f32.mrf.mxu0
    %1114 = vdwg.mxu0
    %v1115 = vsel %vm537, %v1112, -inf
    %1116 = vmax.xlane.f32.xlu0 %v1115
    %v1117 = vpop.xlane.xlu0 %1116
    %v1118 = vsub.f32 %v1112, %v1117
    %v1119 = vmul.f32 %v1118, 1.442695
    %v1120 = vpow.pop %v1119
    %v1121 = vsel %vm537, %v1120, 0.0
    %1122 = vadd.xlane.f32.xlu0 %v1121
    %v1123 = vpop.xlane.xlu0 %1122
    %v1124 = vrcp.pop %v1123
    %v1125 = vmul.f32 %v1120, %v1124
    %v1126 = vpack.c.bf16 %v1125, %v1125
    %1127 = vrot.lane.b32.xlu0 %v1018, 112
    %v1128 = vpop.permute.xlu0 %1127
    %v1131 = vsel %vm537, %v1126, 0
    %1133 = vmatpush.bf16.msra.mxu0 0
    %1134 = vmatpush.bf16.msra.mxu0 0
    %1135 = vmatpush.bf16.msra.mxu0 0
    %1136 = vmatpush.bf16.msra.mxu0 0
    %1137 = vmatpush.bf16.msra.mxu0 0
    %1138 = vmatpush.bf16.msra.mxu0 0
    %1139 = vmatpush.bf16.msra.mxu0 0
    %1140 = vmatpush.bf16.msra.mxu0 %v1128
    %1141 = vmatmul.bf16.gmra.mxu0 %v1131
    %v1142 = vpop.f32.mrf.mxu0
    %v1143 = vadd.f32 0.0, %v1142
    %v1144 = vpop.f32.mrf.mxu0
    %1145 = vdwg.mxu0
    %1146 = vrot.lane.b32.xlu0 %v985, 104
    %v1147 = vpop.permute.xlu0 %1146
    %1148 = vrot.lane.b32.xlu0 %v986, 104
    %v1149 = vpop.permute.xlu0 %1148
    %v1151 = vsel %vm302, %v1147, 0
    %v1154 = vsel %vm302, %v1149, 0
    %1156 = vmatpush.bf16.xpose.msra.mxu0 0
    %1157 = vmatpush.bf16.xpose.msra.mxu0 0
    %1158 = vmatpush.bf16.xpose.msra.mxu0 0
    %1159 = vmatpush.bf16.xpose.msra.mxu0 0
    %1160 = vmatpush.bf16.xpose.msra.mxu0 0
    %1161 = vmatpush.bf16.xpose.msra.mxu0 0
    %1162 = vmatpush.bf16.xpose.msra.mxu0 0
    %1163 = vmatpush.bf16.xpose.msra.mxu0 %v1154
    %1164 = vmatmul.bf16.gmra.mxu0 %v1151
    %v1165 = vpop.f32.mrf.mxu0
    %v1166 = vadd.f32 0.0, %v1165
    %v1167 = vpop.f32.mrf.mxu0
    %1168 = vdwg.mxu0
    %v1169 = vsel %vm537, %v1166, -inf
    %1170 = vmax.xlane.f32.xlu0 %v1169
    %v1171 = vpop.xlane.xlu0 %1170
    %v1172 = vsub.f32 %v1166, %v1171
    %v1173 = vmul.f32 %v1172, 1.442695
    %v1174 = vpow.pop %v1173
    %v1175 = vsel %vm537, %v1174, 0.0
    %1176 = vadd.xlane.f32.xlu0 %v1175
    %v1177 = vpop.xlane.xlu0 %1176
    %v1178 = vrcp.pop %v1177
    %v1179 = vmul.f32 %v1174, %v1178
    %v1180 = vpack.c.bf16 %v1179, %v1179
    %1181 = vrot.lane.b32.xlu0 %v1018, 104
    %v1182 = vpop.permute.xlu0 %1181
    %v1185 = vsel %vm537, %v1180, 0
    %1187 = vmatpush.bf16.msra.mxu0 0
    %1188 = vmatpush.bf16.msra.mxu0 0
    %1189 = vmatpush.bf16.msra.mxu0 0
    %1190 = vmatpush.bf16.msra.mxu0 0
    %1191 = vmatpush.bf16.msra.mxu0 0
    %1192 = vmatpush.bf16.msra.mxu0 0
    %1193 = vmatpush.bf16.msra.mxu0 0
    %1194 = vmatpush.bf16.msra.mxu0 %v1182
    %1195 = vmatmul.bf16.gmra.mxu0 %v1185
    %v1196 = vpop.f32.mrf.mxu0
    %v1197 = vadd.f32 0.0, %v1196
    %v1198 = vpop.f32.mrf.mxu0
    %1199 = vdwg.mxu0
    %1201 = vrot.lane.b32.xlu0 %v1089, 8
    %v1202 = vpop.permute.xlu0 %1201
    %1205 = vrot.lane.b32.xlu0 %v1143, 16
    %v1206 = vpop.permute.xlu0 %1205
    %1209 = vrot.lane.b32.xlu0 %v1197, 24
    %v1210 = vpop.permute.xlu0 %1209
    %v1212 = vsel %vm302, %v1032, %v1202
    %v1213 = vsel %vm537, %v1212, %v1206
    %v1214 = vsel %vm539, %v1213, %v1210
    %v1215 = vpack.c.bf16 %v901, %v901
    %v1216 = vpack.c.bf16 %v946, %v944
    %v1218 = vsel %vm302, %v1215, 0
    %v1221 = vsel %vm302, %v1216, 0
    %1223 = vmatpush.bf16.xpose.msra.mxu0 0
    %1224 = vmatpush.bf16.xpose.msra.mxu0 0
    %1225 = vmatpush.bf16.xpose.msra.mxu0 0
    %1226 = vmatpush.bf16.xpose.msra.mxu0 0
    %1227 = vmatpush.bf16.xpose.msra.mxu0 0
    %1228 = vmatpush.bf16.xpose.msra.mxu0 0
    %1229 = vmatpush.bf16.xpose.msra.mxu0 0
    %1230 = vmatpush.bf16.xpose.msra.mxu0 %v1221
    %1231 = vmatmul.bf16.gmra.mxu0 %v1218
    %v1232 = vpop.f32.mrf.mxu0
    %v1233 = vadd.f32 0.0, %v1232
    %v1234 = vpop.f32.mrf.mxu0
    %1235 = vdwg.mxu0
    %v1236 = vsel %vm537, %v1233, -inf
    %1237 = vmax.xlane.f32.xlu0 %v1236
    %v1238 = vpop.xlane.xlu0 %1237
    %v1239 = vsub.f32 %v1233, %v1238
    %v1240 = vmul.f32 %v1239, 1.442695
    %v1241 = vpow.pop %v1240
    %v1242 = vsel %vm537, %v1241, 0.0
    %1243 = vadd.xlane.f32.xlu0 %v1242
    %v1244 = vpop.xlane.xlu0 %1243
    %v1245 = vrcp.pop %v1244
    %v1246 = vmul.f32 %v1241, %v1245
    %v1247 = vpack.c.bf16 %v1246, %v1246
    %v1248 = vpack.c.bf16 %v983, %v981
    %v1250 = vsel %vm537, %v1247, 0
    %1252 = vmatpush.bf16.msra.mxu0 0
    %1253 = vmatpush.bf16.msra.mxu0 0
    %1254 = vmatpush.bf16.msra.mxu0 0
    %1255 = vmatpush.bf16.msra.mxu0 0
    %1256 = vmatpush.bf16.msra.mxu0 0
    %1257 = vmatpush.bf16.msra.mxu0 0
    %1258 = vmatpush.bf16.msra.mxu0 0
    %1259 = vmatpush.bf16.msra.mxu0 %v1248
    %1260 = vmatmul.bf16.gmra.mxu0 %v1250
    %v1261 = vpop.f32.mrf.mxu0
    %v1262 = vadd.f32 0.0, %v1261
    %v1263 = vpop.f32.mrf.mxu0
    %1264 = vdwg.mxu0
    %1266 = vrot.lane.b32.xlu0 %v1215, 120
    %v1267 = vpop.permute.xlu0 %1266
    %1269 = vrot.lane.b32.xlu0 %v1216, 120
    %v1270 = vpop.permute.xlu0 %1269
    %v1272 = vsel %vm302, %v1267, 0
    %v1275 = vsel %vm302, %v1270, 0
    %1277 = vmatpush.bf16.xpose.msra.mxu0 0
    %1278 = vmatpush.bf16.xpose.msra.mxu0 0
    %1279 = vmatpush.bf16.xpose.msra.mxu0 0
    %1280 = vmatpush.bf16.xpose.msra.mxu0 0
    %1281 = vmatpush.bf16.xpose.msra.mxu0 0
    %1282 = vmatpush.bf16.xpose.msra.mxu0 0
    %1283 = vmatpush.bf16.xpose.msra.mxu0 0
    %1284 = vmatpush.bf16.xpose.msra.mxu0 %v1275
    %1285 = vmatmul.bf16.gmra.mxu0 %v1272
    %v1286 = vpop.f32.mrf.mxu0
    %v1287 = vadd.f32 0.0, %v1286
    %v1288 = vpop.f32.mrf.mxu0
    %1289 = vdwg.mxu0
    %v1290 = vsel %vm537, %v1287, -inf
    %1291 = vmax.xlane.f32.xlu0 %v1290
    %v1292 = vpop.xlane.xlu0 %1291
    %v1293 = vsub.f32 %v1287, %v1292
    %v1294 = vmul.f32 %v1293, 1.442695
    %v1295 = vpow.pop %v1294
    %v1296 = vsel %vm537, %v1295, 0.0
    %1297 = vadd.xlane.f32.xlu0 %v1296
    %v1298 = vpop.xlane.xlu0 %1297
    %v1299 = vrcp.pop %v1298
    %v1300 = vmul.f32 %v1295, %v1299
    %v1301 = vpack.c.bf16 %v1300, %v1300
    %1303 = vrot.lane.b32.xlu0 %v1248, 120
    %v1304 = vpop.permute.xlu0 %1303
    %v1307 = vsel %vm537, %v1301, 0
    %1309 = vmatpush.bf16.msra.mxu0 0
    %1310 = vmatpush.bf16.msra.mxu0 0
    %1311 = vmatpush.bf16.msra.mxu0 0
    %1312 = vmatpush.bf16.msra.mxu0 0
    %1313 = vmatpush.bf16.msra.mxu0 0
    %1314 = vmatpush.bf16.msra.mxu0 0
    %1315 = vmatpush.bf16.msra.mxu0 0
    %1316 = vmatpush.bf16.msra.mxu0 %v1304
    %1317 = vmatmul.bf16.gmra.mxu0 %v1307
    %v1318 = vpop.f32.mrf.mxu0
    %v1319 = vadd.f32 0.0, %v1318
    %v1320 = vpop.f32.mrf.mxu0
    %1321 = vdwg.mxu0
    %1322 = vrot.lane.b32.xlu0 %v1215, 112
    %v1323 = vpop.permute.xlu0 %1322
    %1324 = vrot.lane.b32.xlu0 %v1216, 112
    %v1325 = vpop.permute.xlu0 %1324
    %v1327 = vsel %vm302, %v1323, 0
    %v1330 = vsel %vm302, %v1325, 0
    %1332 = vmatpush.bf16.xpose.msra.mxu0 0
    %1333 = vmatpush.bf16.xpose.msra.mxu0 0
    %1334 = vmatpush.bf16.xpose.msra.mxu0 0
    %1335 = vmatpush.bf16.xpose.msra.mxu0 0
    %1336 = vmatpush.bf16.xpose.msra.mxu0 0
    %1337 = vmatpush.bf16.xpose.msra.mxu0 0
    %1338 = vmatpush.bf16.xpose.msra.mxu0 0
    %1339 = vmatpush.bf16.xpose.msra.mxu0 %v1330
    %1340 = vmatmul.bf16.gmra.mxu0 %v1327
    %v1341 = vpop.f32.mrf.mxu0
    %v1342 = vadd.f32 0.0, %v1341
    %v1343 = vpop.f32.mrf.mxu0
    %1344 = vdwg.mxu0
    %v1345 = vsel %vm537, %v1342, -inf
    %1346 = vmax.xlane.f32.xlu0 %v1345
    %v1347 = vpop.xlane.xlu0 %1346
    %v1348 = vsub.f32 %v1342, %v1347
    %v1349 = vmul.f32 %v1348, 1.442695
    %v1350 = vpow.pop %v1349
    %v1351 = vsel %vm537, %v1350, 0.0
    %1352 = vadd.xlane.f32.xlu0 %v1351
    %v1353 = vpop.xlane.xlu0 %1352
    %v1354 = vrcp.pop %v1353
    %v1355 = vmul.f32 %v1350, %v1354
    %v1356 = vpack.c.bf16 %v1355, %v1355
    %1357 = vrot.lane.b32.xlu0 %v1248, 112
    %v1358 = vpop.permute.xlu0 %1357
    %v1361 = vsel %vm537, %v1356, 0
    %1363 = vmatpush.bf16.msra.mxu0 0
    %1364 = vmatpush.bf16.msra.mxu0 0
    %1365 = vmatpush.bf16.msra.mxu0 0
    %1366 = vmatpush.bf16.msra.mxu0 0
    %1367 = vmatpush.bf16.msra.mxu0 0
    %1368 = vmatpush.bf16.msra.mxu0 0
    %1369 = vmatpush.bf16.msra.mxu0 0
    %1370 = vmatpush.bf16.msra.mxu0 %v1358
    %1371 = vmatmul.bf16.gmra.mxu0 %v1361
    %v1372 = vpop.f32.mrf.mxu0
    %v1373 = vadd.f32 0.0, %v1372
    %v1374 = vpop.f32.mrf.mxu0
    %1375 = vdwg.mxu0
    %1376 = vrot.lane.b32.xlu0 %v1215, 104
    %v1377 = vpop.permute.xlu0 %1376
    %1378 = vrot.lane.b32.xlu0 %v1216, 104
    %v1379 = vpop.permute.xlu0 %1378
    %v1381 = vsel %vm302, %v1377, 0
    %v1384 = vsel %vm302, %v1379, 0
    %1386 = vmatpush.bf16.xpose.msra.mxu0 0
    %1387 = vmatpush.bf16.xpose.msra.mxu0 0
    %1388 = vmatpush.bf16.xpose.msra.mxu0 0
    %1389 = vmatpush.bf16.xpose.msra.mxu0 0
    %1390 = vmatpush.bf16.xpose.msra.mxu0 0
    %1391 = vmatpush.bf16.xpose.msra.mxu0 0
    %1392 = vmatpush.bf16.xpose.msra.mxu0 0
    %1393 = vmatpush.bf16.xpose.msra.mxu0 %v1384
    %1394 = vmatmul.bf16.gmra.mxu0 %v1381
    %v1395 = vpop.f32.mrf.mxu0
    %v1396 = vadd.f32 0.0, %v1395
    %v1397 = vpop.f32.mrf.mxu0
    %1398 = vdwg.mxu0
    %v1399 = vsel %vm537, %v1396, -inf
    %1400 = vmax.xlane.f32.xlu0 %v1399
    %v1401 = vpop.xlane.xlu0 %1400
    %v1402 = vsub.f32 %v1396, %v1401
    %v1403 = vmul.f32 %v1402, 1.442695
    %v1404 = vpow.pop %v1403
    %v1405 = vsel %vm537, %v1404, 0.0
    %1406 = vadd.xlane.f32.xlu0 %v1405
    %v1407 = vpop.xlane.xlu0 %1406
    %v1408 = vrcp.pop %v1407
    %v1409 = vmul.f32 %v1404, %v1408
    %v1410 = vpack.c.bf16 %v1409, %v1409
    %1411 = vrot.lane.b32.xlu0 %v1248, 104
    %v1412 = vpop.permute.xlu0 %1411
    %v1415 = vsel %vm537, %v1410, 0
    %1417 = vmatpush.bf16.msra.mxu0 0
    %1418 = vmatpush.bf16.msra.mxu0 0
    %1419 = vmatpush.bf16.msra.mxu0 0
    %1420 = vmatpush.bf16.msra.mxu0 0
    %1421 = vmatpush.bf16.msra.mxu0 0
    %1422 = vmatpush.bf16.msra.mxu0 0
    %1423 = vmatpush.bf16.msra.mxu0 0
    %1424 = vmatpush.bf16.msra.mxu0 %v1412
    %1425 = vmatmul.bf16.gmra.mxu0 %v1415
    %v1426 = vpop.f32.mrf.mxu0
    %v1427 = vadd.f32 0.0, %v1426
    %v1428 = vpop.f32.mrf.mxu0
    %1429 = vdwg.mxu0
    %1431 = vrot.lane.b32.xlu0 %v1319, 8
    %v1432 = vpop.permute.xlu0 %1431
    %1435 = vrot.lane.b32.xlu0 %v1373, 16
    %v1436 = vpop.permute.xlu0 %1435
    %1439 = vrot.lane.b32.xlu0 %v1427, 24
    %v1440 = vpop.permute.xlu0 %1439
    %v1442 = vsel %vm302, %v1262, %v1432
    %v1443 = vsel %vm537, %v1442, %v1436
    %v1444 = vsel %vm539, %v1443, %v1440
    %v1445 = vld [vmem:[#allocation14] sm:$0xff]
    %v1446 = vld [vmem:[#allocation14 + $0x8] sm:$0xff]
    %v1447 = vld [vmem:[#allocation14 + $0x10] sm:$0xff]
    %v1448 = vld [vmem:[#allocation14 + $0x18] sm:$0xff]
    %v1449 = vpack.c.bf16 %v1444, %v1214
    %v1450 = vpack.c.bf16 %v1446, %v1445
    %v1451 = vpack.c.bf16 %v1448, %v1447
    %v1452 = vld [vmem:[%s17] sm:$0x1]
    %v1454 = vperm.slane %v1452, 0
    %v1457 = vsel %vm252, %v1449, 0
    %1459 = vmatpush.bf16.msra.mxu0 0
    %1460 = vmatpush.bf16.msra.mxu0 0
    %1461 = vmatpush.bf16.msra.mxu0 0
    %1462 = vmatpush.bf16.msra.mxu0 0
    %1463 = vmatpush.bf16.msra.mxu0 0
    %1464 = vmatpush.bf16.msra.mxu0 0
    %1465 = vmatpush.bf16.msra.mxu0 %v1451
    %1466 = vmatpush.bf16.msra.mxu0 %v1450
    %1467 = vmatmul.bf16.gmra.mxu0 %v1457
    %v1468 = vpop.f32.mrf.mxu0
    %v1469 = vadd.f32 %v1454, %v1468
    %v1470 = vpop.f32.mrf.mxu0
    %v1471 = vadd.f32 %v1454, %v1470
    %1472 = vdwg.mxu0
    %v1473 = vadd.f32 %v871, %v1469
    %v1474 = vadd.f32 %v872, %v1471
    %v1475 = vld [vmem:[%s24] sm:$0x1]
    %v1476 = vld [vmem:[%s25] sm:$0x1]
    %v1477 = vsel %vm252, %v1473, 0.0
    %1478 = vadd.xlane.f32.xlu0 %v1477
    %v1479 = vpop.xlane.xlu0 %1478
    %v1480 = vsel %vm252, %v1474, 0.0
    %1481 = vadd.xlane.f32.xlu0 %v1480
    %v1482 = vpop.xlane.xlu0 %1481
    %v1483 = vmul.f32 %v1479, %v824
    %v1484 = vmul.f32 %v1482, %v824
    %v1485 = vsub.f32 %v1473, %v1483
    %v1486 = vsub.f32 %v1474, %v1484
    %v1487 = vmul.f32 %v1485, %v1485
    %v1488 = vmul.f32 %v1486, %v1486
    %v1489 = vsel %vm252, %v1487, 0.0
    %1490 = vadd.xlane.f32.xlu0 %v1489
    %v1491 = vpop.xlane.xlu0 %1490
    %v1492 = vsel %vm252, %v1488, 0.0
    %1493 = vadd.xlane.f32.xlu0 %v1492
    %v1494 = vpop.xlane.xlu0 %1493
    %v1495 = vmul.f32 %v1491, %v824
    %v1496 = vmul.f32 %v1494, %v824
    %v1497 = vadd.f32 %v1495, 1e-05
    %v1498 = vadd.f32 %v1496, 1e-05
    %v1499 = vrsqrt.pop %v1497
    %v1500 = vmul.f32 %v1499, %v1497
    %v1501 = vmul.f32 %v1500, %v1499
    %v1502 = vmul.f32 0.5, %v1501
    %v1503 = vsub.f32 1.5, %v1502
    %v1504 = vmul.f32 %v1499, %v1503
    %vm1505 = vweird.f32 %v1497
    %vm1506 = vweird.f32 %v1499
    %vm1507 = vmor %vm1505, %vm1506
    %v1508 = vsel %vm1507, %v1499, %v1504
    %v1509 = vrsqrt.pop %v1498
    %v1510 = vmul.f32 %v1509, %v1498
    %v1511 = vmul.f32 %v1510, %v1509
    %v1512 = vmul.f32 0.5, %v1511
    %v1513 = vsub.f32 1.5, %v1512
    %v1514 = vmul.f32 %v1509, %v1513
    %vm1515 = vweird.f32 %v1498
    %vm1516 = vweird.f32 %v1509
    %vm1517 = vmor %vm1515, %vm1516
    %v1518 = vsel %vm1517, %v1509, %v1514
    %v1519 = vmul.f32 %v1485, %v1508
    %v1520 = vmul.f32 %v1486, %v1518
    %v1522 = vperm.slane %v1475, 0
    %v1524 = vmul.f32 %v1519, %v1522
    %v1525 = vmul.f32 %v1520, %v1522
    %v1527 = vperm.slane %v1476, 0
    %v1529 = vadd.f32 %v1524, %v1527
    %v1530 = vadd.f32 %v1525, %v1527
    %v1531 = vld [vmem:[#allocation16] sm:$0xff]
    %v1532 = vld [vmem:[#allocation16 + $0x8] sm:$0xff]
    %v1533 = vld [vmem:[#allocation16 + $0x10] sm:$0xff]
    %v1534 = vld [vmem:[#allocation16 + $0x18] sm:$0xff]
    %v1535 = vpack.c.bf16 %v1530, %v1529
    %v1536 = vpack.c.bf16 %v1532, %v1531
    %v1537 = vpack.c.bf16 %v1534, %v1533
    %v1538 = vld [vmem:[%s19] sm:$0x1]
    %v1540 = vperm.slane %v1538, 0
    %v1543 = vsel %vm252, %v1535, 0
    %1545 = vmatpush.bf16.msra.mxu0 0
    %1546 = vmatpush.bf16.msra.mxu0 0
    %1547 = vmatpush.bf16.msra.mxu0 0
    %1548 = vmatpush.bf16.msra.mxu0 0
    %1549 = vmatpush.bf16.msra.mxu0 0
    %1550 = vmatpush.bf16.msra.mxu0 0
    %1551 = vmatpush.bf16.msra.mxu0 %v1537
    %1552 = vmatpush.bf16.msra.mxu0 %v1536
    %1553 = vmatmul.bf16.gmra.mxu0 %v1543
    %v1554 = vpop.f32.mrf.mxu0
    %v1555 = vadd.f32 %v1540, %v1554
    %v1556 = vpop.f32.mrf.mxu0
    %v1557 = vadd.f32 %v1540, %v1556
    %1558 = vdwg.mxu0
    %v1559 = vmax.f32 %v1555, 0.0
    %v1560 = vmax.f32 %v1557, 0.0
    %v1561 = vld [vmem:[%s20] sm:$0xff]
    %v1562 = vld [vmem:[%s20 + $0x8] sm:$0xff]
    %v1563 = vld [vmem:[%s20 + $0x10] sm:$0xff]
    %v1564 = vld [vmem:[%s20 + $0x18] sm:$0xff]
    %v1565 = vld [vmem:[%s20 + $0x20] sm:$0xff]
    %v1566 = vld [vmem:[%s20 + $0x28] sm:$0xff]
    %v1567 = vld [vmem:[%s20 + $0x30] sm:$0xff]
    %v1568 = vld [vmem:[%s20 + $0x38] sm:$0xff]
    %v1569 = vpack.c.bf16 %v1560, %v1559
    %v1570 = vpack.c.bf16 %v1562, %v1561
    %v1571 = vpack.c.bf16 %v1564, %v1563
    %v1572 = vpack.c.bf16 %v1566, %v1565
    %v1573 = vpack.c.bf16 %v1568, %v1567
    %v1574 = vld [vmem:[%s21] sm:$0x1]
    %v1576 = vperm.slane %v1574, 0
    %vm1578 = vcmask 523264
    %v1580 = vsel %vm1578, %v1569, 0
    %1582 = vmatpush.bf16.msra.mxu0 0
    %1583 = vmatpush.bf16.msra.mxu0 0
    %1584 = vmatpush.bf16.msra.mxu0 0
    %1585 = vmatpush.bf16.msra.mxu0 0
    %1586 = vmatpush.bf16.msra.mxu0 %v1573
    %1587 = vmatpush.bf16.msra.mxu0 %v1572
    %1588 = vmatpush.bf16.msra.mxu0 %v1571
    %1589 = vmatpush.bf16.msra.mxu0 %v1570
    %1590 = vmatmul.bf16.gmra.mxu0 %v1580
    %v1591 = vpop.f32.mrf.mxu0
    %v1592 = vadd.f32 %v1576, %v1591
    %v1593 = vpop.f32.mrf.mxu0
    %v1594 = vadd.f32 %v1576, %v1593
    %1595 = vdwg.mxu0
    %v1596 = vadd.f32 %v1529, %v1592
    %v1597 = vadd.f32 %v1530, %v1594
    %v1598 = vld [vmem:[%s26] sm:$0x1]
    %v1599 = vld [vmem:[%s27] sm:$0x1]
    %v1600 = vsel %vm252, %v1596, 0.0
    %1601 = vadd.xlane.f32.xlu0 %v1600
    %v1602 = vpop.xlane.xlu0 %1601
    %v1603 = vsel %vm252, %v1597, 0.0
    %1604 = vadd.xlane.f32.xlu0 %v1603
    %v1605 = vpop.xlane.xlu0 %1604
    %v1606 = vmul.f32 %v1602, %v824
    %v1607 = vmul.f32 %v1605, %v824
    %v1608 = vsub.f32 %v1596, %v1606
    %v1609 = vsub.f32 %v1597, %v1607
    %v1610 = vmul.f32 %v1608, %v1608
    %v1611 = vmul.f32 %v1609, %v1609
    %v1612 = vsel %vm252, %v1610, 0.0
    %1613 = vadd.xlane.f32.xlu0 %v1612
    %v1614 = vpop.xlane.xlu0 %1613
    %v1615 = vsel %vm252, %v1611, 0.0
    %1616 = vadd.xlane.f32.xlu0 %v1615
    %v1617 = vpop.xlane.xlu0 %1616
    %v1618 = vmul.f32 %v1614, %v824
    %v1619 = vmul.f32 %v1617, %v824
    %v1620 = vadd.f32 %v1618, 1e-05
    %v1621 = vadd.f32 %v1619, 1e-05
    %v1622 = vrsqrt.pop %v1620
    %v1623 = vmul.f32 %v1622, %v1620
    %v1624 = vmul.f32 %v1623, %v1622
    %v1625 = vmul.f32 0.5, %v1624
    %v1626 = vsub.f32 1.5, %v1625
    %v1627 = vmul.f32 %v1622, %v1626
    %vm1628 = vweird.f32 %v1620
    %vm1629 = vweird.f32 %v1622
    %vm1630 = vmor %vm1628, %vm1629
    %v1631 = vsel %vm1630, %v1622, %v1627
    %v1632 = vrsqrt.pop %v1621
    %v1633 = vmul.f32 %v1632, %v1621
    %v1634 = vmul.f32 %v1633, %v1632
    %v1635 = vmul.f32 0.5, %v1634
    %v1636 = vsub.f32 1.5, %v1635
    %v1637 = vmul.f32 %v1632, %v1636
    %vm1638 = vweird.f32 %v1621
    %vm1639 = vweird.f32 %v1632
    %vm1640 = vmor %vm1638, %vm1639
    %v1641 = vsel %vm1640, %v1632, %v1637
    %v1642 = vmul.f32 %v1608, %v1631
    %v1643 = vmul.f32 %v1609, %v1641
    %v1645 = vperm.slane %v1598, 0
    %v1647 = vmul.f32 %v1642, %v1645
    %v1648 = vmul.f32 %v1643, %v1645
    %v1650 = vperm.slane %v1599, 0
    %v1652 = vadd.f32 %v1647, %v1650
    %v1653 = vadd.f32 %v1648, %v1650
    %1654 = vst.msk [vmem:[#allocation17] sm:$0xff] %vm252, %v1652
    %1655 = vst.msk [vmem:[#allocation17 + $0x8] sm:$0xff] %vm252, %v1653
    // Predicated region
    $region150: #{tpu_custom_call.1} parent=1 // pred_check
      _
    $region151: #{tpu_custom_call.1} parent=1 // pred_check_branch
      %1657 = sbr.rel (0) target = $region153
    $region152: #{tpu_custom_call.1} parent=1 // pred_region
      %1659 = vsyncadd [#allocation4], 0
      %s1660 = sshll.u32 [#allocation17], 4
      %s1661 = int_to_ptr.vmem [resolvable:$true] %s1660
      %s1662 = sshll.u32 %s28, 4
      %s1663 = int_to_ptr.hbm [resolvable:$true] %s1662
      %1668 = dma.vmem_to_hbm [thread:$0]  %s1661, 256, %s1663, [#allocation4], 128, 128, 8
    $region153: #{tpu_custom_call.1} parent=1 // pred_fallthru
      _
    // Predicated region
    $region154: #{tpu_custom_call.1} parent=1 // pred_check
      _
    $region155: #{tpu_custom_call.1} parent=1 // pred_check_branch
      %1670 = sbr.rel (0) target = $region157
    $region156: #{tpu_custom_call.1} parent=1 // pred_region
      %1672 = dma.done [#allocation4], 256
    $region157: #{tpu_custom_call.1} parent=1 // pred_fallthru
      _
    %1673 = vsyncpa [#allocation3], 1
    %1674 = vsyncpa [#allocation6], 1
    %1675 = vsyncpa [#allocation9], 1
    %1676 = vsyncpa [#allocation12], 1
    %1677 = vsyncpa [#allocation15], 1
    %1678 = vsyncpa [#allocation4], 1

</llo_original>
